<compile_context>
chip_gen: v7x
topology: tpu7x:2x2x1
jax: 0.10.0
libtpu: 0.0.40
codegen_flags: <defaults>
</compile_context>

<pallas_src>
import math

import jax
import jax.numpy as jnp
import numpy as np
from jax.experimental import pallas as pl
from jax.experimental.pallas import tpu as pltpu

# ----------------------------- problem sizes (small demo) -----------------------------
AGENTS = 3
OBS_SHAPE_N = [6, 5, 7]          # per-agent observation sizes  (sum = 18)
ACT_SHAPE_N = [2, 3, 2]          # per-agent action sizes       (sum = 7)
FEATURES = 32                    # args.critic_features_num
NF = AGENTS * FEATURES           # 96
LANE = 128                       # TPU lane width; every per-agent chunk gets its own group
D_TOT = sum(o + a for o, a in zip(OBS_SHAPE_N, ACT_SHAPE_N))   # 25
D_PAD = LANE                     # x feature axis zero-padded to a full lane group
BATCH = 64
QKV_W = 3 * AGENTS * LANE        # 1152 : [q0|q1|q2|k0|k1|k2|v0|v1|v2], 128 lanes each


# ------------------------------------ Pallas kernel ------------------------------------
def critic_attention_kernel(x_ref, w_enc_ref, w_qkv_ref, w_o_ref, w_dec_ref, b_ref, out_ref):
    """Fused encoders -> 1-head attention -> decoders for one batch tile.

    x_ref     : (TB, 128)        packed [obs_i|act_i] per agent, zero-padded
    w_enc_ref : (128, 128)       block-diag encoders  (cols 0:NF real, rest zero)
    w_qkv_ref : (128, 1152)      block-diag q|k|v, each agent in its own 128-lane group
                                 (1/sqrt(F) folded into the q block)
    w_o_ref   : (384, 128)       block-diag output projection over the 128-lane y groups
    w_dec_ref : (128, 128)       block-diag decoders, padded to 128 output lanes
    b_ref     : (4, 1152)        rows: b_enc | b_qkv | b_o | b_dec (zero-padded lanes)
    out_ref   : (TB, 128)        lane-dense output; cols 0:AGENTS are the real values
    """
    N = AGENTS
    G = LANE

    b_enc = b_ref[0:1, 0:G]
    b_qkv = b_ref[1:2, :]
    b_o = b_ref[2:3, 0:G]
    b_dec = b_ref[3:4, 0:G]

    x = x_ref[...]                                                      # (TB, 128)

    # ---- fused per-agent encoders: ONE matmul for all agents ----
    f_all = jnp.maximum(
        jnp.dot(x, w_enc_ref[...], preferred_element_type=jnp.float32) + b_enc, 0.0)   # (TB,128)

    # ---- fused q/k/v projections, each agent chunk in its own 128-lane group ----
    qkv = jnp.maximum(
        jnp.dot(f_all, w_qkv_ref[...], preferred_element_type=jnp.float32) + b_qkv, 0.0)  # (TB,1152)

    # 128-lane-aligned views; pad lanes are exactly zero (zero weights + zero bias -> relu 0)
    q = [qkv[:, i * G:(i + 1) * G] for i in range(N)]
    k = [qkv[:, (N + i) * G:(N + i + 1) * G] for i in range(N)]
    v = [qkv[:, (2 * N + i) * G:(2 * N + i + 1) * G] for i in range(N)]

    # ---- per-batch scaled dot-product attention over the tiny (N=3) agent axis ----
    # Full 128-lane reductions (pad lanes contribute zeros); the 1/sqrt(F) scale is
    # already folded into the q weights, so there is no per-score multiply here.
    y_groups = []
    for n in range(N):
        s = [jnp.sum(q[n] * k[m], axis=-1, keepdims=True) for m in range(N)]   # (TB,1) x N
        s_max = s[0]
        for m in range(1, N):
            s_max = jnp.maximum(s_max, s[m])
        e = [jnp.exp(sm - s_max) for sm in s]                                   # EUP
        denom = e[0]
        for m in range(1, N):
            denom = denom + e[m]
        inv = pl.reciprocal(denom, approx=False)                                # exact
        y_n = e[0] * v[0]
        for m in range(1, N):
            y_n = y_n + e[m] * v[m]
        y_groups.append(y_n * inv)                                              # (TB,128)
    y_all = jnp.concatenate(y_groups, axis=1)                                   # (TB, 384), 128-aligned

    # ---- fused attention output projection (+ relu): ONE matmul ----
    yo = jnp.maximum(
        jnp.dot(y_all, w_o_ref[...], preferred_element_type=jnp.float32) + b_o, 0.0)    # (TB,128)

    # ---- fused per-agent decoders + single lane-dense output store ----
    pre = jnp.dot(yo, w_dec_ref[...], preferred_element_type=jnp.float32) + b_dec       # (TB,128)
    out_ref[...] = jnp.maximum(pre, 0.0)


# ------------------------------------- host packing -------------------------------------
def pack_x(obs, act):
    """Concat per-agent [obs_i, act_i] along features, zero-pad to 128 lanes -> (B, 128)."""
    parts, ho, ha = [], 0, 0
    for i in range(AGENTS):
        parts.append(obs[:, ho:ho + OBS_SHAPE_N[i]])
        parts.append(act[:, ha:ha + ACT_SHAPE_N[i]])
        ho += OBS_SHAPE_N[i]
        ha += ACT_SHAPE_N[i]
    x = jnp.concatenate(parts, axis=1)                                 # (B, D_TOT)
    return jnp.pad(x, ((0, 0), (0, D_PAD - D_TOT))).astype(jnp.float32)


def pack_params(p):
    """Build the lane-aligned block-diagonal weight slabs + bias slab used by the kernel.

    All pad rows/cols/lanes are exactly zero so that ReLU keeps pad lanes at zero and the
    full-vreg score reductions never pick up garbage.
    """
    N, F, G = AGENTS, FEATURES, LANE
    scale = 1.0 / math.sqrt(F)
    dims = [o + a for o, a in zip(OBS_SHAPE_N, ACT_SHAPE_N)]

    # fused encoder: block-diag over agents at the cumulative x offsets
    w_enc = np.zeros((D_PAD, G), np.float32)
    b_enc = np.zeros((G,), np.float32)
    r = 0
    for i in range(N):
        w_enc[r:r + dims[i], i * F:(i + 1) * F] = np.asarray(p["wenc"][i])
        b_enc[i * F:(i + 1) * F] = np.asarray(p["benc"][i])
        r += dims[i]

    # fused q|k|v projections: each agent gets its own 128-lane output group;
    # 1/sqrt(F) folded into the q block (ReLU is positively homogeneous).
    w_qkv = np.zeros((G, QKV_W), np.float32)
    b_qkv = np.zeros((QKV_W,), np.float32)
    for i in range(N):
        rows = slice(i * F, (i + 1) * F)
        w_qkv[rows, i * G:i * G + F] = scale * np.asarray(p["wq"])
        w_qkv[rows, (N + i) * G:(N + i) * G + F] = np.asarray(p["wk"])
        w_qkv[rows, (2 * N + i) * G:(2 * N + i) * G + F] = np.asarray(p["wv"])
        b_qkv[i * G:i * G + F] = scale * np.asarray(p["bq"])
        b_qkv[(N + i) * G:(N + i) * G + F] = np.asarray(p["bk"])
        b_qkv[(2 * N + i) * G:(2 * N + i) * G + F] = np.asarray(p["bv"])

    # fused output projection: input rows are the 128-lane y groups
    w_o = np.zeros((N * G, G), np.float32)
    b_o = np.zeros((G,), np.float32)
    for i in range(N):
        w_o[i * G:i * G + F, i * F:(i + 1) * F] = np.asarray(p["wo"])
        b_o[i * F:(i + 1) * F] = np.asarray(p["bo"])

    # fused per-agent decoders, padded to a lane-dense 128-column output
    w_dec = np.zeros((G, G), np.float32)
    b_dec = np.zeros((G,), np.float32)
    for i in range(N):
        w_dec[i * F:(i + 1) * F, i] = np.asarray(p["wdec"][i])
        b_dec[i] = float(p["bdec"][i])

    bias = np.zeros((4, QKV_W), np.float32)
    bias[0, :G] = b_enc
    bias[1, :] = b_qkv
    bias[2, :G] = b_o
    bias[3, :G] = b_dec

    return (jnp.asarray(w_enc), jnp.asarray(w_qkv), jnp.asarray(w_o),
            jnp.asarray(w_dec), jnp.asarray(bias))


# ------------------------------------- host wrapper -------------------------------------
def critic_attention_forward(obs, act, packed, *, tile_b=None):
    """tile_b=None -> single grid step (best for this size on single-TC v5e/v6e;
    set a multiple of 8 to re-enable batch tiling / v7x 2-TC sharding for big batches)."""
    w_enc, w_qkv, w_o, w_dec, bias = packed
    x = pack_x(obs, act)                                               # (B, 128)
    B = x.shape[0]
    tb = B if tile_b is None else tile_b
    assert B % tb == 0 and (tb % 8 == 0 or tb == B)
    grid = (B // tb,)

    out = pl.pallas_call(
        critic_attention_kernel,
        out_shape=jax.ShapeDtypeStruct((B, LANE), jnp.float32),
        grid=grid,
        in_specs=[
            pl.BlockSpec((tb, D_PAD), lambda g: (g, 0)),               # x (pipelined over batch)
            pl.BlockSpec(w_enc.shape, lambda g: (0, 0)),               # fused encoder slab
            pl.BlockSpec(w_qkv.shape, lambda g: (0, 0)),               # fused q|k|v slab
            pl.BlockSpec(w_o.shape, lambda g: (0, 0)),                 # fused wo slab
            pl.BlockSpec(w_dec.shape, lambda g: (0, 0)),               # fused decoder slab
            pl.BlockSpec(bias.shape, lambda g: (0, 0)),                # fused bias slab
        ],
        out_specs=pl.BlockSpec((tb, LANE), lambda g: (g, 0)),          # lane-dense store
        compiler_params=pltpu.CompilerParams(
            dimension_semantics=("parallel",)),
    )(x, w_enc, w_qkv, w_o, w_dec, bias)

    return out[:, :AGENTS]                                             # drop the zero pad lanes


# ---------------------------------- pure-JAX reference ----------------------------------
def reference_forward(obs, act, p):
    fs, ho, ha = [], 0, 0
    for i in range(AGENTS):
        xi = jnp.concatenate([obs[:, ho:ho + OBS_SHAPE_N[i]],
                              act[:, ha:ha + ACT_SHAPE_N[i]]], axis=1)
        ho += OBS_SHAPE_N[i]
        ha += ACT_SHAPE_N[i]
        fs.append(jax.nn.relu(xi @ p["wenc"][i] + p["benc"][i]))
    f = jnp.stack(fs, axis=1)                                          # (B, N, F)
    q = jax.nn.relu(f @ p["wq"] + p["bq"])
    k = jax.nn.relu(f @ p["wk"] + p["bk"])
    v = jax.nn.relu(f @ p["wv"] + p["bv"])
    s = jnp.einsum("bnf,bmf->bnm", q, k) / math.sqrt(FEATURES)
    a = jax.nn.softmax(s, axis=-1)
    y = jnp.einsum("bnm,bmf->bnf", a, v)
    yo = jax.nn.relu(y @ p["wo"] + p["bo"])
    pre = jnp.einsum("bnf,nf->bn", yo, p["wdec"]) + p["bdec"][None, :]
    return jax.nn.relu(pre)


# ---------------------------------- parameter creation ----------------------------------
def make_params(key):
    dims = [o + a for o, a in zip(OBS_SHAPE_N, ACT_SHAPE_N)]
    keys = iter(jax.random.split(key, 32))
    init = lambda shape, s=0.1: (s * jax.random.normal(next(keys), shape)).astype(jnp.float32)
    return {
        "wenc": [init((d, FEATURES)) for d in dims],     # per-agent Coder(in_i, F) weights (x @ W)
        "benc": [init((FEATURES,)) for _ in dims],
        "wq": init((FEATURES, FEATURES)), "bq": init((FEATURES,)),
        "wk": init((FEATURES, FEATURES)), "bk": init((FEATURES,)),
        "wv": init((FEATURES, FEATURES)), "bv": init((FEATURES,)),
        "wo": init((FEATURES, FEATURES)), "bo": init((FEATURES,)),
        "wdec": init((AGENTS, FEATURES)),                # per-agent Coder(F, 1) weight rows
        "bdec": init((AGENTS,)),
    }


if __name__ == "__main__":
    key = jax.random.PRNGKey(0)
    k_obs, k_act, k_par = jax.random.split(key, 3)

    obs = jax.random.normal(k_obs, (BATCH, sum(OBS_SHAPE_N)), jnp.float32)
    act = jax.random.normal(k_act, (BATCH, sum(ACT_SHAPE_N)), jnp.float32)
    params = make_params(k_par)
    packed = pack_params(params)                      # one-time host-side weight fusion

    out = critic_attention_forward(obs, act, packed)
    out = jax.block_until_ready(out)

    ref = jax.block_until_ready(reference_forward(obs, act, params))
    np.testing.assert_allclose(np.asarray(out), np.asarray(ref), rtol=5e-3, atol=2e-3)

    assert out.shape == (BATCH, AGENTS)
    print("KERNEL_OK")
</pallas_src>

<mosaic_0001>
module attributes {stable_mosaic.version = 11 : i64} {
  func.func @critic_attention_kernel(%arg0: i32, %arg1: memref<64x128xf32, #tpu.memory_space<vmem>>, %arg2: memref<128x128xf32, #tpu.memory_space<vmem>>, %arg3: memref<128x1152xf32, #tpu.memory_space<vmem>>, %arg4: memref<384x128xf32, #tpu.memory_space<vmem>>, %arg5: memref<128x128xf32, #tpu.memory_space<vmem>>, %arg6: memref<4x1152xf32, #tpu.memory_space<vmem>>, %arg7: memref<64x128xf32, #tpu.memory_space<vmem>>) attributes {dimension_semantics = [#tpu.dimension_semantics<parallel>], iteration_bounds = array<i64: 1>, scalar_prefetch = 0 : i64, scratch_operands = 0 : i64, tpu.core_type = #tpu.core_type<tc>, window_params = [{transform_indices = @transform_0, window_bounds = array<i64: 64, 128>}, {pipeline_mode = #tpu.pipeline_mode<synchronous>, transform_indices = @transform_1, window_bounds = array<i64: 128, 128>}, {pipeline_mode = #tpu.pipeline_mode<synchronous>, transform_indices = @transform_2, window_bounds = array<i64: 128, 1152>}, {pipeline_mode = #tpu.pipeline_mode<synchronous>, transform_indices = @transform_3, window_bounds = array<i64: 384, 128>}, {pipeline_mode = #tpu.pipeline_mode<synchronous>, transform_indices = @transform_4, window_bounds = array<i64: 128, 128>}, {pipeline_mode = #tpu.pipeline_mode<synchronous>, transform_indices = @transform_5, window_bounds = array<i64: 4, 1152>}, {transform_indices = @transform_6, window_bounds = array<i64: 64, 128>}]} {
    %c0 = arith.constant 0 : index
    %c0_0 = arith.constant 0 : index
    %0 = vector.load %arg6[%c0, %c0_0] : memref<4x1152xf32, #tpu.memory_space<vmem>>, vector<1x128xf32>
    %c1 = arith.constant 1 : index
    %c0_1 = arith.constant 0 : index
    %1 = vector.load %arg6[%c1, %c0_1] : memref<4x1152xf32, #tpu.memory_space<vmem>>, vector<1x1152xf32>
    %c2 = arith.constant 2 : index
    %c0_2 = arith.constant 0 : index
    %2 = vector.load %arg6[%c2, %c0_2] : memref<4x1152xf32, #tpu.memory_space<vmem>>, vector<1x128xf32>
    %c3 = arith.constant 3 : index
    %c0_3 = arith.constant 0 : index
    %3 = vector.load %arg6[%c3, %c0_3] : memref<4x1152xf32, #tpu.memory_space<vmem>>, vector<1x128xf32>
    %c0_4 = arith.constant 0 : index
    %c0_5 = arith.constant 0 : index
    %4 = vector.load %arg1[%c0_4, %c0_5] : memref<64x128xf32, #tpu.memory_space<vmem>>, vector<64x128xf32>
    %c0_6 = arith.constant 0 : index
    %c0_7 = arith.constant 0 : index
    %5 = vector.load %arg2[%c0_6, %c0_7] : memref<128x128xf32, #tpu.memory_space<vmem>>, vector<128x128xf32>
    %cst = arith.constant dense<0.000000e+00> : vector<64x128xf32>
    %6 = tpu.matmul %4, %5, %cst {dimension_numbers = #tpu.dot_dimension_numbers<[1], [0], [0], [1], [0, 0, 1, 1], [], []>} : vector<64x128xf32>, vector<128x128xf32>, vector<64x128xf32> -> vector<64x128xf32>
    %7 = vector.broadcast %0 : vector<1x128xf32> to vector<64x128xf32>
    %8 = arith.addf %6, %7 : vector<64x128xf32>
    %cst_8 = arith.constant 0.000000e+00 : f32
    %9 = vector.broadcast %cst_8 : f32 to vector<64x128xf32>
    %10 = arith.maximumf %8, %9 : vector<64x128xf32>
    %c0_9 = arith.constant 0 : index
    %c0_10 = arith.constant 0 : index
    %11 = vector.load %arg3[%c0_9, %c0_10] : memref<128x1152xf32, #tpu.memory_space<vmem>>, vector<128x1152xf32>
    %cst_11 = arith.constant dense<0.000000e+00> : vector<64x1152xf32>
    %12 = tpu.matmul %10, %11, %cst_11 {dimension_numbers = #tpu.dot_dimension_numbers<[1], [0], [0], [1], [0, 0, 1, 1], [], []>} : vector<64x128xf32>, vector<128x1152xf32>, vector<64x1152xf32> -> vector<64x1152xf32>
    %13 = vector.broadcast %1 : vector<1x1152xf32> to vector<64x1152xf32>
    %14 = arith.addf %12, %13 : vector<64x1152xf32>
    %cst_12 = arith.constant 0.000000e+00 : f32
    %15 = vector.broadcast %cst_12 : f32 to vector<64x1152xf32>
    %16 = arith.maximumf %14, %15 : vector<64x1152xf32>
    %17 = vector.extract_strided_slice %16 {offsets = [0, 0], sizes = [64, 128], strides = [1, 1]} : vector<64x1152xf32> to vector<64x128xf32>
    %18 = vector.extract_strided_slice %16 {offsets = [0, 128], sizes = [64, 128], strides = [1, 1]} : vector<64x1152xf32> to vector<64x128xf32>
    %19 = vector.extract_strided_slice %16 {offsets = [0, 256], sizes = [64, 128], strides = [1, 1]} : vector<64x1152xf32> to vector<64x128xf32>
    %20 = vector.extract_strided_slice %16 {offsets = [0, 384], sizes = [64, 128], strides = [1, 1]} : vector<64x1152xf32> to vector<64x128xf32>
    %21 = vector.extract_strided_slice %16 {offsets = [0, 512], sizes = [64, 128], strides = [1, 1]} : vector<64x1152xf32> to vector<64x128xf32>
    %22 = vector.extract_strided_slice %16 {offsets = [0, 640], sizes = [64, 128], strides = [1, 1]} : vector<64x1152xf32> to vector<64x128xf32>
    %23 = vector.extract_strided_slice %16 {offsets = [0, 768], sizes = [64, 128], strides = [1, 1]} : vector<64x1152xf32> to vector<64x128xf32>
    %24 = vector.extract_strided_slice %16 {offsets = [0, 896], sizes = [64, 128], strides = [1, 1]} : vector<64x1152xf32> to vector<64x128xf32>
    %25 = vector.extract_strided_slice %16 {offsets = [0, 1024], sizes = [64, 128], strides = [1, 1]} : vector<64x1152xf32> to vector<64x128xf32>
    %26 = arith.mulf %17, %20 : vector<64x128xf32>
    %cst_13 = arith.constant dense<0.000000e+00> : vector<64xf32>
    %27 = vector.multi_reduction <add>, %26, %cst_13 [1] : vector<64x128xf32> to vector<64xf32>
    %28 = vector.shape_cast %27 : vector<64xf32> to vector<64x1xf32>
    %29 = arith.mulf %17, %21 : vector<64x128xf32>
    %cst_14 = arith.constant dense<0.000000e+00> : vector<64xf32>
    %30 = vector.multi_reduction <add>, %29, %cst_14 [1] : vector<64x128xf32> to vector<64xf32>
    %31 = vector.shape_cast %30 : vector<64xf32> to vector<64x1xf32>
    %32 = arith.mulf %17, %22 : vector<64x128xf32>
    %cst_15 = arith.constant dense<0.000000e+00> : vector<64xf32>
    %33 = vector.multi_reduction <add>, %32, %cst_15 [1] : vector<64x128xf32> to vector<64xf32>
    %34 = vector.shape_cast %33 : vector<64xf32> to vector<64x1xf32>
    %35 = arith.maximumf %28, %31 : vector<64x1xf32>
    %36 = arith.maximumf %35, %34 : vector<64x1xf32>
    %37 = arith.subf %28, %36 : vector<64x1xf32>
    %38 = math.exp %37 : vector<64x1xf32>
    %39 = arith.subf %31, %36 : vector<64x1xf32>
    %40 = math.exp %39 : vector<64x1xf32>
    %41 = arith.subf %34, %36 : vector<64x1xf32>
    %42 = math.exp %41 : vector<64x1xf32>
    %43 = arith.addf %38, %40 : vector<64x1xf32>
    %44 = arith.addf %43, %42 : vector<64x1xf32>
    %45 = tpu.reciprocal %44 : vector<64x1xf32> -> vector<64x1xf32>
    %46 = vector.broadcast %38 : vector<64x1xf32> to vector<64x128xf32>
    %47 = arith.mulf %46, %23 : vector<64x128xf32>
    %48 = vector.broadcast %40 : vector<64x1xf32> to vector<64x128xf32>
    %49 = arith.mulf %48, %24 : vector<64x128xf32>
    %50 = arith.addf %47, %49 : vector<64x128xf32>
    %51 = vector.broadcast %42 : vector<64x1xf32> to vector<64x128xf32>
    %52 = arith.mulf %51, %25 : vector<64x128xf32>
    %53 = arith.addf %50, %52 : vector<64x128xf32>
    %54 = vector.broadcast %45 : vector<64x1xf32> to vector<64x128xf32>
    %55 = arith.mulf %53, %54 : vector<64x128xf32>
    %56 = arith.mulf %18, %20 : vector<64x128xf32>
    %cst_16 = arith.constant dense<0.000000e+00> : vector<64xf32>
    %57 = vector.multi_reduction <add>, %56, %cst_16 [1] : vector<64x128xf32> to vector<64xf32>
    %58 = vector.shape_cast %57 : vector<64xf32> to vector<64x1xf32>
    %59 = arith.mulf %18, %21 : vector<64x128xf32>
    %cst_17 = arith.constant dense<0.000000e+00> : vector<64xf32>
    %60 = vector.multi_reduction <add>, %59, %cst_17 [1] : vector<64x128xf32> to vector<64xf32>
    %61 = vector.shape_cast %60 : vector<64xf32> to vector<64x1xf32>
    %62 = arith.mulf %18, %22 : vector<64x128xf32>
    %cst_18 = arith.constant dense<0.000000e+00> : vector<64xf32>
    %63 = vector.multi_reduction <add>, %62, %cst_18 [1] : vector<64x128xf32> to vector<64xf32>
    %64 = vector.shape_cast %63 : vector<64xf32> to vector<64x1xf32>
    %65 = arith.maximumf %58, %61 : vector<64x1xf32>
    %66 = arith.maximumf %65, %64 : vector<64x1xf32>
    %67 = arith.subf %58, %66 : vector<64x1xf32>
    %68 = math.exp %67 : vector<64x1xf32>
    %69 = arith.subf %61, %66 : vector<64x1xf32>
    %70 = math.exp %69 : vector<64x1xf32>
    %71 = arith.subf %64, %66 : vector<64x1xf32>
    %72 = math.exp %71 : vector<64x1xf32>
    %73 = arith.addf %68, %70 : vector<64x1xf32>
    %74 = arith.addf %73, %72 : vector<64x1xf32>
    %75 = tpu.reciprocal %74 : vector<64x1xf32> -> vector<64x1xf32>
    %76 = vector.broadcast %68 : vector<64x1xf32> to vector<64x128xf32>
    %77 = arith.mulf %76, %23 : vector<64x128xf32>
    %78 = vector.broadcast %70 : vector<64x1xf32> to vector<64x128xf32>
    %79 = arith.mulf %78, %24 : vector<64x128xf32>
    %80 = arith.addf %77, %79 : vector<64x128xf32>
    %81 = vector.broadcast %72 : vector<64x1xf32> to vector<64x128xf32>
    %82 = arith.mulf %81, %25 : vector<64x128xf32>
    %83 = arith.addf %80, %82 : vector<64x128xf32>
    %84 = vector.broadcast %75 : vector<64x1xf32> to vector<64x128xf32>
    %85 = arith.mulf %83, %84 : vector<64x128xf32>
    %86 = arith.mulf %19, %20 : vector<64x128xf32>
    %cst_19 = arith.constant dense<0.000000e+00> : vector<64xf32>
    %87 = vector.multi_reduction <add>, %86, %cst_19 [1] : vector<64x128xf32> to vector<64xf32>
    %88 = vector.shape_cast %87 : vector<64xf32> to vector<64x1xf32>
    %89 = arith.mulf %19, %21 : vector<64x128xf32>
    %cst_20 = arith.constant dense<0.000000e+00> : vector<64xf32>
    %90 = vector.multi_reduction <add>, %89, %cst_20 [1] : vector<64x128xf32> to vector<64xf32>
    %91 = vector.shape_cast %90 : vector<64xf32> to vector<64x1xf32>
    %92 = arith.mulf %19, %22 : vector<64x128xf32>
    %cst_21 = arith.constant dense<0.000000e+00> : vector<64xf32>
    %93 = vector.multi_reduction <add>, %92, %cst_21 [1] : vector<64x128xf32> to vector<64xf32>
    %94 = vector.shape_cast %93 : vector<64xf32> to vector<64x1xf32>
    %95 = arith.maximumf %88, %91 : vector<64x1xf32>
    %96 = arith.maximumf %95, %94 : vector<64x1xf32>
    %97 = arith.subf %88, %96 : vector<64x1xf32>
    %98 = math.exp %97 : vector<64x1xf32>
    %99 = arith.subf %91, %96 : vector<64x1xf32>
    %100 = math.exp %99 : vector<64x1xf32>
    %101 = arith.subf %94, %96 : vector<64x1xf32>
    %102 = math.exp %101 : vector<64x1xf32>
    %103 = arith.addf %98, %100 : vector<64x1xf32>
    %104 = arith.addf %103, %102 : vector<64x1xf32>
    %105 = tpu.reciprocal %104 : vector<64x1xf32> -> vector<64x1xf32>
    %106 = vector.broadcast %98 : vector<64x1xf32> to vector<64x128xf32>
    %107 = arith.mulf %106, %23 : vector<64x128xf32>
    %108 = vector.broadcast %100 : vector<64x1xf32> to vector<64x128xf32>
    %109 = arith.mulf %108, %24 : vector<64x128xf32>
    %110 = arith.addf %107, %109 : vector<64x128xf32>
    %111 = vector.broadcast %102 : vector<64x1xf32> to vector<64x128xf32>
    %112 = arith.mulf %111, %25 : vector<64x128xf32>
    %113 = arith.addf %110, %112 : vector<64x128xf32>
    %114 = vector.broadcast %105 : vector<64x1xf32> to vector<64x128xf32>
    %115 = arith.mulf %113, %114 : vector<64x128xf32>
    %116 = tpu.concatenate %55, %85, %115 in 1 : vector<64x128xf32>, vector<64x128xf32>, vector<64x128xf32> -> vector<64x384xf32>
    %c0_22 = arith.constant 0 : index
    %c0_23 = arith.constant 0 : index
    %117 = vector.load %arg4[%c0_22, %c0_23] : memref<384x128xf32, #tpu.memory_space<vmem>>, vector<384x128xf32>
    %cst_24 = arith.constant dense<0.000000e+00> : vector<64x128xf32>
    %118 = tpu.matmul %116, %117, %cst_24 {dimension_numbers = #tpu.dot_dimension_numbers<[1], [0], [0], [1], [0, 0, 1, 1], [], []>} : vector<64x384xf32>, vector<384x128xf32>, vector<64x128xf32> -> vector<64x128xf32>
    %119 = vector.broadcast %2 : vector<1x128xf32> to vector<64x128xf32>
    %120 = arith.addf %118, %119 : vector<64x128xf32>
    %cst_25 = arith.constant 0.000000e+00 : f32
    %121 = vector.broadcast %cst_25 : f32 to vector<64x128xf32>
    %122 = arith.maximumf %120, %121 : vector<64x128xf32>
    %c0_26 = arith.constant 0 : index
    %c0_27 = arith.constant 0 : index
    %123 = vector.load %arg5[%c0_26, %c0_27] : memref<128x128xf32, #tpu.memory_space<vmem>>, vector<128x128xf32>
    %cst_28 = arith.constant dense<0.000000e+00> : vector<64x128xf32>
    %124 = tpu.matmul %122, %123, %cst_28 {dimension_numbers = #tpu.dot_dimension_numbers<[1], [0], [0], [1], [0, 0, 1, 1], [], []>} : vector<64x128xf32>, vector<128x128xf32>, vector<64x128xf32> -> vector<64x128xf32>
    %125 = vector.broadcast %3 : vector<1x128xf32> to vector<64x128xf32>
    %126 = arith.addf %124, %125 : vector<64x128xf32>
    %cst_29 = arith.constant 0.000000e+00 : f32
    %127 = vector.broadcast %cst_29 : f32 to vector<64x128xf32>
    %128 = arith.maximumf %126, %127 : vector<64x128xf32>
    %c0_30 = arith.constant 0 : index
    %c0_31 = arith.constant 0 : index
    %129 = vector.load %arg7[%c0_30, %c0_31] : memref<64x128xf32, #tpu.memory_space<vmem>>, vector<64x128xf32>
    tpu.vector_store %arg7[%c0_30, %c0_31], %128 {strides = array<i32>} : memref<64x128xf32, #tpu.memory_space<vmem>>, vector<64x128xf32>,
    return
  }
  func.func @transform_0(%arg0: i32) -> (i32, i32) {
    %c0_i32 = arith.constant 0 : i32
    %c0_i32_0 = arith.constant 0 : i32
    return %arg0, %c0_i32 : i32, i32
  }
  func.func @transform_1(%arg0: i32) -> (i32, i32) {
    %c0_i32 = arith.constant 0 : i32
    %c0_i32_0 = arith.constant 0 : i32
    %c0_i32_1 = arith.constant 0 : i32
    return %c0_i32, %c0_i32_0 : i32, i32
  }
  func.func @transform_2(%arg0: i32) -> (i32, i32) {
    %c0_i32 = arith.constant 0 : i32
    %c0_i32_0 = arith.constant 0 : i32
    %c0_i32_1 = arith.constant 0 : i32
    return %c0_i32, %c0_i32_0 : i32, i32
  }
  func.func @transform_3(%arg0: i32) -> (i32, i32) {
    %c0_i32 = arith.constant 0 : i32
    %c0_i32_0 = arith.constant 0 : i32
    %c0_i32_1 = arith.constant 0 : i32
    return %c0_i32, %c0_i32_0 : i32, i32
  }
  func.func @transform_4(%arg0: i32) -> (i32, i32) {
    %c0_i32 = arith.constant 0 : i32
    %c0_i32_0 = arith.constant 0 : i32
    %c0_i32_1 = arith.constant 0 : i32
    return %c0_i32, %c0_i32_0 : i32, i32
  }
  func.func @transform_5(%arg0: i32) -> (i32, i32) {
    %c0_i32 = arith.constant 0 : i32
    %c0_i32_0 = arith.constant 0 : i32
    %c0_i32_1 = arith.constant 0 : i32
    return %c0_i32, %c0_i32_0 : i32, i32
  }
  func.func @transform_6(%arg0: i32) -> (i32, i32) {
    %c0_i32 = arith.constant 0 : i32
    %c0_i32_0 = arith.constant 0 : i32
    return %arg0, %c0_i32 : i32, i32
  }
}

</mosaic_0001>

<llo_original>
// kernel: tpu_custom_call.1
$region0: #{tpu_custom_call.1}
  #allocation0 [shape = 'u32[]', space=smem, size = 0x4, offset = 0x4, fixed_abs, tag = 'smem constant byte address 0x4 - core index']
  #allocation1 [shape = 'u32[144,128]{1,0:T(1,128)}', space=vmem, size = 0x12000, scoped, tag = 'internal scratch']
  %s0 = inlined_call_operand.hbm [shape: f32[64,128], index: 0, kind: input, shape index: {}]
  %s1 = inlined_call_operand.hbm [shape: f32[128,128], index: 1, kind: input, shape index: {}]
  %s2 = inlined_call_operand.hbm [shape: f32[128,1152], index: 2, kind: input, shape index: {}]
  %s3 = inlined_call_operand.hbm [shape: f32[384,128], index: 3, kind: input, shape index: {}]
  %s4 = inlined_call_operand.hbm [shape: f32[128,128], index: 4, kind: input, shape index: {}]
  %s5 = inlined_call_operand.hbm [shape: f32[4,1152], index: 5, kind: input, shape index: {}]
  %s6 = inlined_call_operand.hbm [shape: f32[64,128], index: 6, kind: output, shape index: {}]
  %s7 = sld [smem:[#allocation0]]
  $region58: #{tpu_custom_call.1} parent=0
    _
  %s9 = ssub.s32 1, %s7
  %s10 = scalar_select 0, %s9, %s7
  $region1: #{tpu_custom_call.1} parent=0
    #allocation2 [shape = 'u8[32768]{0}', space=vmem, size = 0x8000, scoped, tag = 'input window, operand 0, single buffered']
    #allocation3 [shape = 's32[1]{0}', space=sflag, size = 0x4, scoped, tag = 'scoped memory for tpu_custom_call.1']
    #allocation4 [shape = 's32[1]{0}', space=sflag, size = 0x4, scoped, tag = 'scoped memory for tpu_custom_call.1']
    #allocation5 [shape = 'u8[65536]{0}', space=vmem, size = 0x10000, scoped, tag = 'input window, operand 1, single buffered']
    #allocation6 [shape = 's32[1]{0}', space=sflag, size = 0x4, scoped, tag = 'scoped memory for tpu_custom_call.1']
    #allocation7 [shape = 'u8[589824]{0}', space=vmem, size = 0x90000, scoped, tag = 'input window, operand 2, single buffered']
    #allocation8 [shape = 'u8[196608]{0}', space=vmem, size = 0x30000, scoped, tag = 'input window, operand 3, single buffered']
    #allocation9 [shape = 's32[1]{0}', space=sflag, size = 0x4, scoped, tag = 'scoped memory for tpu_custom_call.1']
    #allocation10 [shape = 'u8[65536]{0}', space=vmem, size = 0x10000, scoped, tag = 'input window, operand 4, single buffered']
    #allocation11 [shape = 'u8[18432]{0}', space=vmem, size = 0x4800, scoped, tag = 'input window, operand 5, single buffered']
    #allocation12 [shape = 's32[1]{0}', space=sflag, size = 0x4, scoped, tag = 'scoped memory for tpu_custom_call.1']
    #allocation13 [shape = 'u8[32768]{0}', space=vmem, size = 0x8000, scoped, tag = 'output window, operand 0, single buffered']
    %11 = vsyncpa [#allocation3], 0
    %12 = vsyncpa [#allocation6], 0
    %13 = vsyncpa [#allocation9], 0
    %14 = vsyncpa [#allocation12], 0
    %15 = vsyncpa [#allocation4], 0
    // Predicated region
    $region2: #{tpu_custom_call.1} parent=1 // pred_check
      _
    $region3: #{tpu_custom_call.1} parent=1 // pred_check_branch
      %17 = sbr.rel (0) target = $region5
    $region4: #{tpu_custom_call.1} parent=1 // pred_region
      %s19 = ssub.s32 1024, 1024
      %20 = vsyncadd [#allocation3], %s19
      %s21 = sshll.u32 [#allocation2], 4
      %s22 = int_to_ptr.vmem [resolvable:$true] %s21
      %27 = dma.hbm_to_vmem [thread:$0]  %s0, 1024, %s22, [#allocation3], 128, 128, 8
    $region5: #{tpu_custom_call.1} parent=1 // pred_fallthru
      _
    // Predicated region
    $region6: #{tpu_custom_call.1} parent=1 // pred_check
      _
    $region7: #{tpu_custom_call.1} parent=1 // pred_check_branch
      %29 = sbr.rel (0) target = $region9
    $region8: #{tpu_custom_call.1} parent=1 // pred_region
      %s31 = ssub.s32 2048, 2048
      %32 = vsyncadd [#allocation6], %s31
      %s33 = sshll.u32 [#allocation5], 4
      %s34 = int_to_ptr.vmem [resolvable:$true] %s33
      %39 = dma.hbm_to_vmem [thread:$0]  %s1, 2048, %s34, [#allocation6], 128, 128, 8
    $region9: #{tpu_custom_call.1} parent=1 // pred_fallthru
      _
    // Predicated region
    $region10: #{tpu_custom_call.1} parent=1 // pred_check
      _
    $region11: #{tpu_custom_call.1} parent=1 // pred_check_branch
      %41 = sbr.rel (0) target = $region13
    $region12: #{tpu_custom_call.1} parent=1 // pred_region
      %s43 = ssub.s32 18432, 18432
      %44 = vsyncadd [#allocation6], %s43
      %s45 = sshll.u32 [#allocation7], 4
      %s46 = int_to_ptr.vmem [resolvable:$true] %s45
      %51 = dma.hbm_to_vmem [thread:$0]  %s2, 18432, %s46, [#allocation6], 1152, 1152, 72
    $region13: #{tpu_custom_call.1} parent=1 // pred_fallthru
      _
    // Predicated region
    $region14: #{tpu_custom_call.1} parent=1 // pred_check
      _
    $region15: #{tpu_custom_call.1} parent=1 // pred_check_branch
      %53 = sbr.rel (0) target = $region17
    $region16: #{tpu_custom_call.1} parent=1 // pred_region
      %s55 = ssub.s32 6144, 6144
      %56 = vsyncadd [#allocation9], %s55
      %s57 = sshll.u32 [#allocation8], 4
      %s58 = int_to_ptr.vmem [resolvable:$true] %s57
      %63 = dma.hbm_to_vmem [thread:$0]  %s3, 6144, %s58, [#allocation9], 128, 128, 8
    $region17: #{tpu_custom_call.1} parent=1 // pred_fallthru
      _
    // Predicated region
    $region18: #{tpu_custom_call.1} parent=1 // pred_check
      _
    $region19: #{tpu_custom_call.1} parent=1 // pred_check_branch
      %65 = sbr.rel (0) target = $region21
    $region20: #{tpu_custom_call.1} parent=1 // pred_region
      %s67 = ssub.s32 2048, 2048
      %68 = vsyncadd [#allocation9], %s67
      %s69 = sshll.u32 [#allocation10], 4
      %s70 = int_to_ptr.vmem [resolvable:$true] %s69
      %75 = dma.hbm_to_vmem [thread:$0]  %s4, 2048, %s70, [#allocation9], 128, 128, 8
    $region21: #{tpu_custom_call.1} parent=1 // pred_fallthru
      _
    // Predicated region
    $region22: #{tpu_custom_call.1} parent=1 // pred_check
      _
    $region23: #{tpu_custom_call.1} parent=1 // pred_check_branch
      %77 = sbr.rel (0) target = $region25
    $region24: #{tpu_custom_call.1} parent=1 // pred_region
      %s79 = ssub.s32 576, 576
      %80 = vsyncadd [#allocation12], %s79
      %s82 = sshll.u32 [#allocation11], 4
      %s83 = int_to_ptr.vmem [resolvable:$true] %s82
      %85 = dma.hbm_to_vmem [thread:$0]  %s5, 576, %s83, [#allocation12]
    $region25: #{tpu_custom_call.1} parent=1 // pred_fallthru
      _
    // Predicated region
    $region26: #{tpu_custom_call.1} parent=1 // pred_check
      _
    $region27: #{tpu_custom_call.1} parent=1 // pred_check_branch
      %87 = sbr.rel (0) target = $region29
    $region28: #{tpu_custom_call.1} parent=1 // pred_region
      %88 = dma.done [#allocation3], 1024
    $region29: #{tpu_custom_call.1} parent=1 // pred_fallthru
      _
    // Predicated region
    $region30: #{tpu_custom_call.1} parent=1 // pred_check
      _
    $region31: #{tpu_custom_call.1} parent=1 // pred_check_branch
      %90 = sbr.rel (0) target = $region33
    $region32: #{tpu_custom_call.1} parent=1 // pred_region
      %91 = dma.done [#allocation6], 2048
    $region33: #{tpu_custom_call.1} parent=1 // pred_fallthru
      _
    // Predicated region
    $region34: #{tpu_custom_call.1} parent=1 // pred_check
      _
    $region35: #{tpu_custom_call.1} parent=1 // pred_check_branch
      %93 = sbr.rel (0) target = $region37
    $region36: #{tpu_custom_call.1} parent=1 // pred_region
      %94 = dma.done [#allocation6], 18432
    $region37: #{tpu_custom_call.1} parent=1 // pred_fallthru
      _
    // Predicated region
    $region38: #{tpu_custom_call.1} parent=1 // pred_check
      _
    $region39: #{tpu_custom_call.1} parent=1 // pred_check_branch
      %96 = sbr.rel (0) target = $region41
    $region40: #{tpu_custom_call.1} parent=1 // pred_region
      %97 = dma.done [#allocation9], 6144
    $region41: #{tpu_custom_call.1} parent=1 // pred_fallthru
      _
    // Predicated region
    $region42: #{tpu_custom_call.1} parent=1 // pred_check
      _
    $region43: #{tpu_custom_call.1} parent=1 // pred_check_branch
      %99 = sbr.rel (0) target = $region45
    $region44: #{tpu_custom_call.1} parent=1 // pred_region
      %100 = dma.done [#allocation9], 2048
    $region45: #{tpu_custom_call.1} parent=1 // pred_fallthru
      _
    // Predicated region
    $region46: #{tpu_custom_call.1} parent=1 // pred_check
      _
    $region47: #{tpu_custom_call.1} parent=1 // pred_check_branch
      %102 = sbr.rel (0) target = $region49
    $region48: #{tpu_custom_call.1} parent=1 // pred_region
      %103 = dma.done [#allocation12], 576
    $region49: #{tpu_custom_call.1} parent=1 // pred_fallthru
      _
    %v104 = vld [vmem:[#allocation11] sm:$0x1]
    %s105 = scalar_lea.vmem [#allocation11], 1
    %v106 = vld [vmem:[%s105] ss:$4 sm:$0xff]
    %s107 = scalar_lea.vmem [#allocation11], 33
    %v108 = vld [vmem:[%s107] ss:$4 sm:$0x1]
    %v109 = vld [vmem:[#allocation11 + $0x2] sm:$0x1]
    %v110 = vld [vmem:[#allocation11 + $0x3] sm:$0x1]
    %v111 = vld [vmem:[#allocation2] sm:$0xff]
    %v112 = vld [vmem:[#allocation2 + $0x8] sm:$0xff]
    %v113 = vld [vmem:[#allocation2 + $0x10] sm:$0xff]
    %v114 = vld [vmem:[#allocation2 + $0x18] sm:$0xff]
    %v115 = vld [vmem:[#allocation2 + $0x20] sm:$0xff]
    %v116 = vld [vmem:[#allocation2 + $0x28] sm:$0xff]
    %v117 = vld [vmem:[#allocation2 + $0x30] sm:$0xff]
    %v118 = vld [vmem:[#allocation2 + $0x38] sm:$0xff]
    %v119 = vld [vmem:[#allocation5] sm:$0xff]
    %v120 = vld [vmem:[#allocation5 + $0x8] sm:$0xff]
    %v121 = vld [vmem:[#allocation5 + $0x10] sm:$0xff]
    %v122 = vld [vmem:[#allocation5 + $0x18] sm:$0xff]
    %v123 = vld [vmem:[#allocation5 + $0x20] sm:$0xff]
    %v124 = vld [vmem:[#allocation5 + $0x28] sm:$0xff]
    %v125 = vld [vmem:[#allocation5 + $0x30] sm:$0xff]
    %v126 = vld [vmem:[#allocation5 + $0x38] sm:$0xff]
    %v127 = vld [vmem:[#allocation5 + $0x40] sm:$0xff]
    %v128 = vld [vmem:[#allocation5 + $0x48] sm:$0xff]
    %v129 = vld [vmem:[#allocation5 + $0x50] sm:$0xff]
    %v130 = vld [vmem:[#allocation5 + $0x58] sm:$0xff]
    %v131 = vld [vmem:[#allocation5 + $0x60] sm:$0xff]
    %v132 = vld [vmem:[#allocation5 + $0x68] sm:$0xff]
    %v133 = vld [vmem:[#allocation5 + $0x70] sm:$0xff]
    %v134 = vld [vmem:[#allocation5 + $0x78] sm:$0xff]
    %v135 = vlaneseq
    %v136 = vshrl.u32 %v135, 7
    %v137 = vsub.s32 0, %v136
    %v138 = vrot.slane %v104, %v137
    %139 = vmatprep.subr.mxu0 0.0
    %140 = vmatpush1.msra.mxu0 %v119
    %141 = vmatprep.subr.mxu0 0.0
    %142 = vmatpush1.msra.mxu0 %v120
    %143 = vmatprep.subr.mxu0 0.0
    %144 = vmatpush1.msra.mxu0 %v121
    %145 = vmatprep.subr.mxu0 0.0
    %146 = vmatpush1.msra.mxu0 %v122
    %147 = vmatprep.subr.mxu0 0.0
    %148 = vmatpush1.msra.mxu0 %v123
    %149 = vmatprep.subr.mxu0 0.0
    %150 = vmatpush1.msra.mxu0 %v124
    %151 = vmatprep.subr.mxu0 0.0
    %152 = vmatpush1.msra.mxu0 %v125
    %153 = vmatprep.subr.mxu0 0.0
    %154 = vmatpush1.msra.mxu0 %v126
    %155 = vmatprep.subr.mxu0 0.0
    %156 = vmatpush1.msra.mxu0 %v127
    %157 = vmatprep.subr.mxu0 0.0
    %158 = vmatpush1.msra.mxu0 %v128
    %159 = vmatprep.subr.mxu0 0.0
    %160 = vmatpush1.msra.mxu0 %v129
    %161 = vmatprep.subr.mxu0 0.0
    %162 = vmatpush1.msra.mxu0 %v130
    %163 = vmatprep.subr.mxu0 0.0
    %164 = vmatpush1.msra.mxu0 %v131
    %165 = vmatprep.subr.mxu0 0.0
    %166 = vmatpush1.msra.mxu0 %v132
    %167 = vmatprep.subr.mxu0 0.0
    %168 = vmatpush1.msra.mxu0 %v133
    %169 = vmatprep.subr.mxu0 0.0
    %170 = vmatpush1.msra.mxu0 %v134
    %171 = vmatprep.subr.mxu0 0.0
    %172 = vmatpush1.msra.mxu0 0.0
    %173 = vmatprep.subr.mxu0 0.0
    %174 = vmatpush1.msra.mxu0 0.0
    %175 = vmatprep.subr.mxu0 0.0
    %176 = vmatpush1.msra.mxu0 0.0
    %177 = vmatprep.subr.mxu0 0.0
    %178 = vmatpush1.msra.mxu0 0.0
    %179 = vmatprep.subr.mxu0 0.0
    %180 = vmatpush1.msra.mxu0 0.0
    %181 = vmatprep.subr.mxu0 0.0
    %182 = vmatpush1.msra.mxu0 0.0
    %183 = vmatprep.subr.mxu0 0.0
    %184 = vmatpush1.msra.mxu0 0.0
    %185 = vmatprep.subr.mxu0 0.0
    %186 = vmatpush1.msra.mxu0 0.0
    %187 = vmatprep.subr.mxu0 0.0
    %188 = vmatpush1.msra.mxu0 0.0
    %189 = vmatprep.subr.mxu0 0.0
    %190 = vmatpush1.msra.mxu0 0.0
    %191 = vmatprep.subr.mxu0 0.0
    %192 = vmatpush1.msra.mxu0 0.0
    %193 = vmatprep.subr.mxu0 0.0
    %194 = vmatpush1.msra.mxu0 0.0
    %195 = vmatprep.subr.mxu0 0.0
    %196 = vmatpush1.msra.mxu0 0.0
    %197 = vmatprep.subr.mxu0 0.0
    %198 = vmatpush1.msra.mxu0 0.0
    %199 = vmatprep.subr.mxu0 0.0
    %200 = vmatpush1.msra.mxu0 0.0
    %201 = vmatprep.subr.mxu0 0.0
    %202 = vmatpush1.msra.mxu0 0.0
    %203 = vmatprep.mubr.f32.mxu0 0.0
    %204 = vmatmul.mubr.f32.gmra.mrb[0].mxu0 %v111
    %v205 = vpop.f32.mrb[0].mxu0
    %v206 = vadd.f32 %v138, %v205
    %v207 = vpop.f32.mrb[0].mxu0
    %208 = vmatprep.mubr.f32.mxu0 0.0
    %209 = vmatmul.mubr.f32.gmra.mrb[0].mxu0 %v112
    %v210 = vpop.f32.mrb[0].mxu0
    %v211 = vadd.f32 %v138, %v210
    %v212 = vpop.f32.mrb[0].mxu0
    %213 = vmatprep.mubr.f32.mxu0 0.0
    %214 = vmatmul.mubr.f32.gmra.mrb[0].mxu0 %v113
    %v215 = vpop.f32.mrb[0].mxu0
    %v216 = vadd.f32 %v138, %v215
    %v217 = vpop.f32.mrb[0].mxu0
    %218 = vmatprep.mubr.f32.mxu0 0.0
    %219 = vmatmul.mubr.f32.gmra.mrb[0].mxu0 %v114
    %v220 = vpop.f32.mrb[0].mxu0
    %v221 = vadd.f32 %v138, %v220
    %v222 = vpop.f32.mrb[0].mxu0
    %223 = vmatprep.mubr.f32.mxu0 0.0
    %224 = vmatmul.mubr.f32.gmra.mrb[0].mxu0 %v115
    %v225 = vpop.f32.mrb[0].mxu0
    %v226 = vadd.f32 %v138, %v225
    %v227 = vpop.f32.mrb[0].mxu0
    %228 = vmatprep.mubr.f32.mxu0 0.0
    %229 = vmatmul.mubr.f32.gmra.mrb[0].mxu0 %v116
    %v230 = vpop.f32.mrb[0].mxu0
    %v231 = vadd.f32 %v138, %v230
    %v232 = vpop.f32.mrb[0].mxu0
    %233 = vmatprep.mubr.f32.mxu0 0.0
    %234 = vmatmul.mubr.f32.gmra.mrb[0].mxu0 %v117
    %v235 = vpop.f32.mrb[0].mxu0
    %v236 = vadd.f32 %v138, %v235
    %v237 = vpop.f32.mrb[0].mxu0
    %238 = vmatprep.mubr.f32.mxu0 0.0
    %239 = vmatmul.mubr.f32.gmra.mrb[0].mxu0 %v118
    %v240 = vpop.f32.mrb[0].mxu0
    %v241 = vadd.f32 %v138, %v240
    %v242 = vpop.f32.mrb[0].mxu0
    %243 = vdwg.mxu0
    %v244 = vmax.f32 %v206, 0.0
    %v245 = vmax.f32 %v211, 0.0
    %v246 = vmax.f32 %v216, 0.0
    %v247 = vmax.f32 %v221, 0.0
    %v248 = vmax.f32 %v226, 0.0
    %v249 = vmax.f32 %v231, 0.0
    %v250 = vmax.f32 %v236, 0.0
    %v251 = vmax.f32 %v241, 0.0
    %v252 = vld [vmem:[#allocation7] sm:$0xff]
    %v253 = vld [vmem:[#allocation7 + $0x8] sm:$0xff]
    %v254 = vld [vmem:[#allocation7 + $0x10] sm:$0xff]
    %v255 = vld [vmem:[#allocation7 + $0x18] sm:$0xff]
    %v256 = vld [vmem:[#allocation7 + $0x20] sm:$0xff]
    %v257 = vld [vmem:[#allocation7 + $0x28] sm:$0xff]
    %v258 = vld [vmem:[#allocation7 + $0x30] sm:$0xff]
    %v259 = vld [vmem:[#allocation7 + $0x38] sm:$0xff]
    %v260 = vld [vmem:[#allocation7 + $0x40] sm:$0xff]
    %v261 = vld [vmem:[#allocation7 + $0x48] sm:$0xff]
    %v262 = vld [vmem:[#allocation7 + $0x50] sm:$0xff]
    %v263 = vld [vmem:[#allocation7 + $0x58] sm:$0xff]
    %v264 = vld [vmem:[#allocation7 + $0x60] sm:$0xff]
    %v265 = vld [vmem:[#allocation7 + $0x68] sm:$0xff]
    %v266 = vld [vmem:[#allocation7 + $0x70] sm:$0xff]
    %v267 = vld [vmem:[#allocation7 + $0x78] sm:$0xff]
    %v268 = vld [vmem:[#allocation7 + $0x80] sm:$0xff]
    %v269 = vld [vmem:[#allocation7 + $0x88] sm:$0xff]
    %v270 = vld [vmem:[#allocation7 + $0x90] sm:$0xff]
    %v271 = vld [vmem:[#allocation7 + $0x98] sm:$0xff]
    %v272 = vld [vmem:[#allocation7 + $0xa0] sm:$0xff]
    %v273 = vld [vmem:[#allocation7 + $0xa8] sm:$0xff]
    %v274 = vld [vmem:[#allocation7 + $0xb0] sm:$0xff]
    %v275 = vld [vmem:[#allocation7 + $0xb8] sm:$0xff]
    %v276 = vld [vmem:[#allocation7 + $0xc0] sm:$0xff]
    %v277 = vld [vmem:[#allocation7 + $0xc8] sm:$0xff]
    %v278 = vld [vmem:[#allocation7 + $0xd0] sm:$0xff]
    %v279 = vld [vmem:[#allocation7 + $0xd8] sm:$0xff]
    %v280 = vld [vmem:[#allocation7 + $0xe0] sm:$0xff]
    %v281 = vld [vmem:[#allocation7 + $0xe8] sm:$0xff]
    %v282 = vld [vmem:[#allocation7 + $0xf0] sm:$0xff]
    %v283 = vld [vmem:[#allocation7 + $0xf8] sm:$0xff]
    %v284 = vld [vmem:[#allocation7 + $0x100] sm:$0xff]
    %v285 = vld [vmem:[#allocation7 + $0x108] sm:$0xff]
    %v286 = vld [vmem:[#allocation7 + $0x110] sm:$0xff]
    %v287 = vld [vmem:[#allocation7 + $0x118] sm:$0xff]
    %v288 = vld [vmem:[#allocation7 + $0x120] sm:$0xff]
    %v289 = vld [vmem:[#allocation7 + $0x128] sm:$0xff]
    %v290 = vld [vmem:[#allocation7 + $0x130] sm:$0xff]
    %v291 = vld [vmem:[#allocation7 + $0x138] sm:$0xff]
    %v292 = vld [vmem:[#allocation7 + $0x140] sm:$0xff]
    %v293 = vld [vmem:[#allocation7 + $0x148] sm:$0xff]
    %v294 = vld [vmem:[#allocation7 + $0x150] sm:$0xff]
    %v295 = vld [vmem:[#allocation7 + $0x158] sm:$0xff]
    %v296 = vld [vmem:[#allocation7 + $0x160] sm:$0xff]
    %v297 = vld [vmem:[#allocation7 + $0x168] sm:$0xff]
    %v298 = vld [vmem:[#allocation7 + $0x170] sm:$0xff]
    %v299 = vld [vmem:[#allocation7 + $0x178] sm:$0xff]
    %v300 = vld [vmem:[#allocation7 + $0x180] sm:$0xff]
    %v301 = vld [vmem:[#allocation7 + $0x188] sm:$0xff]
    %v302 = vld [vmem:[#allocation7 + $0x190] sm:$0xff]
    %v303 = vld [vmem:[#allocation7 + $0x198] sm:$0xff]
    %v304 = vld [vmem:[#allocation7 + $0x1a0] sm:$0xff]
    %v305 = vld [vmem:[#allocation7 + $0x1a8] sm:$0xff]
    %v306 = vld [vmem:[#allocation7 + $0x1b0] sm:$0xff]
    %v307 = vld [vmem:[#allocation7 + $0x1b8] sm:$0xff]
    %v308 = vld [vmem:[#allocation7 + $0x1c0] sm:$0xff]
    %v309 = vld [vmem:[#allocation7 + $0x1c8] sm:$0xff]
    %v310 = vld [vmem:[#allocation7 + $0x1d0] sm:$0xff]
    %v311 = vld [vmem:[#allocation7 + $0x1d8] sm:$0xff]
    %v312 = vld [vmem:[#allocation7 + $0x1e0] sm:$0xff]
    %v313 = vld [vmem:[#allocation7 + $0x1e8] sm:$0xff]
    %v314 = vld [vmem:[#allocation7 + $0x1f0] sm:$0xff]
    %v315 = vld [vmem:[#allocation7 + $0x1f8] sm:$0xff]
    %v316 = vld [vmem:[#allocation7 + $0x200] sm:$0xff]
    %v317 = vld [vmem:[#allocation7 + $0x208] sm:$0xff]
    %v318 = vld [vmem:[#allocation7 + $0x210] sm:$0xff]
    %v319 = vld [vmem:[#allocation7 + $0x218] sm:$0xff]
    %v320 = vld [vmem:[#allocation7 + $0x220] sm:$0xff]
    %v321 = vld [vmem:[#allocation7 + $0x228] sm:$0xff]
    %v322 = vld [vmem:[#allocation7 + $0x230] sm:$0xff]
    %v323 = vld [vmem:[#allocation7 + $0x238] sm:$0xff]
    %v324 = vld [vmem:[#allocation7 + $0x240] sm:$0xff]
    %v325 = vld [vmem:[#allocation7 + $0x248] sm:$0xff]
    %v326 = vld [vmem:[#allocation7 + $0x250] sm:$0xff]
    %v327 = vld [vmem:[#allocation7 + $0x258] sm:$0xff]
    %v328 = vld [vmem:[#allocation7 + $0x260] sm:$0xff]
    %v329 = vld [vmem:[#allocation7 + $0x268] sm:$0xff]
    %v330 = vld [vmem:[#allocation7 + $0x270] sm:$0xff]
    %v331 = vld [vmem:[#allocation7 + $0x278] sm:$0xff]
    %v332 = vld [vmem:[#allocation7 + $0x280] sm:$0xff]
    %v333 = vld [vmem:[#allocation7 + $0x288] sm:$0xff]
    %v334 = vld [vmem:[#allocation7 + $0x290] sm:$0xff]
    %v335 = vld [vmem:[#allocation7 + $0x298] sm:$0xff]
    %v336 = vld [vmem:[#allocation7 + $0x2a0] sm:$0xff]
    %v337 = vld [vmem:[#allocation7 + $0x2a8] sm:$0xff]
    %v338 = vld [vmem:[#allocation7 + $0x2b0] sm:$0xff]
    %v339 = vld [vmem:[#allocation7 + $0x2b8] sm:$0xff]
    %v340 = vld [vmem:[#allocation7 + $0x2c0] sm:$0xff]
    %v341 = vld [vmem:[#allocation7 + $0x2c8] sm:$0xff]
    %v342 = vld [vmem:[#allocation7 + $0x2d0] sm:$0xff]
    %v343 = vld [vmem:[#allocation7 + $0x2d8] sm:$0xff]
    %v344 = vld [vmem:[#allocation7 + $0x2e0] sm:$0xff]
    %v345 = vld [vmem:[#allocation7 + $0x2e8] sm:$0xff]
    %v346 = vld [vmem:[#allocation7 + $0x2f0] sm:$0xff]
    %v347 = vld [vmem:[#allocation7 + $0x2f8] sm:$0xff]
    %v348 = vld [vmem:[#allocation7 + $0x300] sm:$0xff]
    %v349 = vld [vmem:[#allocation7 + $0x308] sm:$0xff]
    %v350 = vld [vmem:[#allocation7 + $0x310] sm:$0xff]
    %v351 = vld [vmem:[#allocation7 + $0x318] sm:$0xff]
    %v352 = vld [vmem:[#allocation7 + $0x320] sm:$0xff]
    %v353 = vld [vmem:[#allocation7 + $0x328] sm:$0xff]
    %v354 = vld [vmem:[#allocation7 + $0x330] sm:$0xff]
    %v355 = vld [vmem:[#allocation7 + $0x338] sm:$0xff]
    %v356 = vld [vmem:[#allocation7 + $0x340] sm:$0xff]
    %v357 = vld [vmem:[#allocation7 + $0x348] sm:$0xff]
    %v358 = vld [vmem:[#allocation7 + $0x350] sm:$0xff]
    %v359 = vld [vmem:[#allocation7 + $0x358] sm:$0xff]
    %v360 = vld [vmem:[#allocation7 + $0x360] sm:$0xff]
    %v361 = vld [vmem:[#allocation7 + $0x368] sm:$0xff]
    %v362 = vld [vmem:[#allocation7 + $0x370] sm:$0xff]
    %v363 = vld [vmem:[#allocation7 + $0x378] sm:$0xff]
    %v364 = vld [vmem:[#allocation7 + $0x380] sm:$0xff]
    %v365 = vld [vmem:[#allocation7 + $0x388] sm:$0xff]
    %v366 = vld [vmem:[#allocation7 + $0x390] sm:$0xff]
    %v367 = vld [vmem:[#allocation7 + $0x398] sm:$0xff]
    %v368 = vld [vmem:[#allocation7 + $0x3a0] sm:$0xff]
    %v369 = vld [vmem:[#allocation7 + $0x3a8] sm:$0xff]
    %v370 = vld [vmem:[#allocation7 + $0x3b0] sm:$0xff]
    %v371 = vld [vmem:[#allocation7 + $0x3b8] sm:$0xff]
    %v372 = vld [vmem:[#allocation7 + $0x3c0] sm:$0xff]
    %v373 = vld [vmem:[#allocation7 + $0x3c8] sm:$0xff]
    %v374 = vld [vmem:[#allocation7 + $0x3d0] sm:$0xff]
    %v375 = vld [vmem:[#allocation7 + $0x3d8] sm:$0xff]
    %v376 = vld [vmem:[#allocation7 + $0x3e0] sm:$0xff]
    %v377 = vld [vmem:[#allocation7 + $0x3e8] sm:$0xff]
    %v378 = vld [vmem:[#allocation7 + $0x3f0] sm:$0xff]
    %v379 = vld [vmem:[#allocation7 + $0x3f8] sm:$0xff]
    %v380 = vld [vmem:[#allocation7 + $0x400] sm:$0xff]
    %v381 = vld [vmem:[#allocation7 + $0x408] sm:$0xff]
    %v382 = vld [vmem:[#allocation7 + $0x410] sm:$0xff]
    %v383 = vld [vmem:[#allocation7 + $0x418] sm:$0xff]
    %v384 = vld [vmem:[#allocation7 + $0x420] sm:$0xff]
    %v385 = vld [vmem:[#allocation7 + $0x428] sm:$0xff]
    %v386 = vld [vmem:[#allocation7 + $0x430] sm:$0xff]
    %v387 = vld [vmem:[#allocation7 + $0x438] sm:$0xff]
    %v388 = vld [vmem:[#allocation7 + $0x440] sm:$0xff]
    %v389 = vld [vmem:[#allocation7 + $0x448] sm:$0xff]
    %v390 = vld [vmem:[#allocation7 + $0x450] sm:$0xff]
    %v391 = vld [vmem:[#allocation7 + $0x458] sm:$0xff]
    %v392 = vld [vmem:[#allocation7 + $0x460] sm:$0xff]
    %v393 = vld [vmem:[#allocation7 + $0x468] sm:$0xff]
    %v394 = vld [vmem:[#allocation7 + $0x470] sm:$0xff]
    %v395 = vld [vmem:[#allocation7 + $0x478] sm:$0xff]
    %v398 = vlaneseq
    %v399 = vshrl.u32 %v398, 7
    %v400 = vsub.s32 0, %v399
    %v401 = vrot.slane %v106, %v400
    %v402 = vlaneseq
    %v403 = vshrl.u32 %v402, 7
    %v404 = vsub.s32 1, %v403
    %v405 = vrot.slane %v106, %v404
    %v406 = vlaneseq
    %v407 = vshrl.u32 %v406, 7
    %v408 = vsub.s32 2, %v407
    %v409 = vrot.slane %v106, %v408
    %v410 = vlaneseq
    %v411 = vshrl.u32 %v410, 7
    %v412 = vsub.s32 3, %v411
    %v413 = vrot.slane %v106, %v412
    %v414 = vlaneseq
    %v415 = vshrl.u32 %v414, 7
    %v416 = vsub.s32 4, %v415
    %v417 = vrot.slane %v106, %v416
    %v418 = vlaneseq
    %v419 = vshrl.u32 %v418, 7
    %v420 = vsub.s32 5, %v419
    %v421 = vrot.slane %v106, %v420
    %v422 = vlaneseq
    %v423 = vshrl.u32 %v422, 7
    %v424 = vsub.s32 6, %v423
    %v425 = vrot.slane %v106, %v424
    %v426 = vlaneseq
    %v427 = vshrl.u32 %v426, 7
    %v428 = vsub.s32 7, %v427
    %v429 = vrot.slane %v106, %v428
    %v430 = vlaneseq
    %v431 = vshrl.u32 %v430, 7
    %v432 = vsub.s32 0, %v431
    %v433 = vrot.slane %v108, %v432
    %443 = vmatprep.subr.mxu0 %v253
    %444 = vmatpush1.msra.mxu0 %v252
    %445 = vmatprep.subr.mxu0 %v262
    %446 = vmatpush1.msra.mxu0 %v261
    %447 = vmatprep.subr.mxu0 %v271
    %448 = vmatpush1.msra.mxu0 %v270
    %449 = vmatprep.subr.mxu0 %v280
    %450 = vmatpush1.msra.mxu0 %v279
    %451 = vmatprep.subr.mxu0 %v289
    %452 = vmatpush1.msra.mxu0 %v288
    %453 = vmatprep.subr.mxu0 %v298
    %454 = vmatpush1.msra.mxu0 %v297
    %455 = vmatprep.subr.mxu0 %v307
    %456 = vmatpush1.msra.mxu0 %v306
    %457 = vmatprep.subr.mxu0 %v316
    %458 = vmatpush1.msra.mxu0 %v315
    %459 = vmatprep.subr.mxu0 %v325
    %460 = vmatpush1.msra.mxu0 %v324
    %461 = vmatprep.subr.mxu0 %v334
    %462 = vmatpush1.msra.mxu0 %v333
    %463 = vmatprep.subr.mxu0 %v343
    %464 = vmatpush1.msra.mxu0 %v342
    %465 = vmatprep.subr.mxu0 %v352
    %466 = vmatpush1.msra.mxu0 %v351
    %467 = vmatprep.subr.mxu0 %v361
    %468 = vmatpush1.msra.mxu0 %v360
    %469 = vmatprep.subr.mxu0 %v370
    %470 = vmatpush1.msra.mxu0 %v369
    %471 = vmatprep.subr.mxu0 %v379
    %472 = vmatpush1.msra.mxu0 %v378
    %473 = vmatprep.subr.mxu0 %v388
    %474 = vmatpush1.msra.mxu0 %v387
    %475 = vmatprep.subr.mxu0 0.0
    %476 = vmatpush1.msra.mxu0 0.0
    %477 = vmatprep.subr.mxu0 0.0
    %478 = vmatpush1.msra.mxu0 0.0
    %479 = vmatprep.subr.mxu0 0.0
    %480 = vmatpush1.msra.mxu0 0.0
    %481 = vmatprep.subr.mxu0 0.0
    %482 = vmatpush1.msra.mxu0 0.0
    %483 = vmatprep.subr.mxu0 0.0
    %484 = vmatpush1.msra.mxu0 0.0
    %485 = vmatprep.subr.mxu0 0.0
    %486 = vmatpush1.msra.mxu0 0.0
    %487 = vmatprep.subr.mxu0 0.0
    %488 = vmatpush1.msra.mxu0 0.0
    %489 = vmatprep.subr.mxu0 0.0
    %490 = vmatpush1.msra.mxu0 0.0
    %491 = vmatprep.subr.mxu0 0.0
    %492 = vmatpush1.msra.mxu0 0.0
    %493 = vmatprep.subr.mxu0 0.0
    %494 = vmatpush1.msra.mxu0 0.0
    %495 = vmatprep.subr.mxu0 0.0
    %496 = vmatpush1.msra.mxu0 0.0
    %497 = vmatprep.subr.mxu0 0.0
    %498 = vmatpush1.msra.mxu0 0.0
    %499 = vmatprep.subr.mxu0 0.0
    %500 = vmatpush1.msra.mxu0 0.0
    %501 = vmatprep.subr.mxu0 0.0
    %502 = vmatpush1.msra.mxu0 0.0
    %503 = vmatprep.subr.mxu0 0.0
    %504 = vmatpush1.msra.mxu0 0.0
    %505 = vmatprep.subr.mxu0 0.0
    %506 = vmatpush1.msra.mxu0 0.0
    %507 = vmatprep.mubr.f32.mxu0 0.0
    %508 = vmatmul.mubr.f32.gmra.mrb[0].mxu0 %v244
    %v509 = vpop.f32.mrb[0].mxu0
    %v510 = vadd.f32 %v401, %v509
    %v511 = vpop.f32.mrb[0].mxu0
    %v512 = vadd.f32 %v405, %v511
    %513 = vmatprep.mubr.f32.mxu0 0.0
    %514 = vmatmul.mubr.f32.gmra.mrb[0].mxu0 %v245
    %v515 = vpop.f32.mrb[0].mxu0
    %v516 = vadd.f32 %v401, %v515
    %v517 = vpop.f32.mrb[0].mxu0
    %v518 = vadd.f32 %v405, %v517
    %519 = vmatprep.mubr.f32.mxu0 0.0
    %520 = vmatmul.mubr.f32.gmra.mrb[0].mxu0 %v246
    %v521 = vpop.f32.mrb[0].mxu0
    %v522 = vadd.f32 %v401, %v521
    %v523 = vpop.f32.mrb[0].mxu0
    %v524 = vadd.f32 %v405, %v523
    %525 = vmatprep.mubr.f32.mxu0 0.0
    %526 = vmatmul.mubr.f32.gmra.mrb[0].mxu0 %v247
    %v527 = vpop.f32.mrb[0].mxu0
    %v528 = vadd.f32 %v401, %v527
    %v529 = vpop.f32.mrb[0].mxu0
    %v530 = vadd.f32 %v405, %v529
    %531 = vmatprep.mubr.f32.mxu0 0.0
    %532 = vmatmul.mubr.f32.gmra.mrb[0].mxu0 %v248
    %v533 = vpop.f32.mrb[0].mxu0
    %v534 = vadd.f32 %v401, %v533
    %v535 = vpop.f32.mrb[0].mxu0
    %v536 = vadd.f32 %v405, %v535
    %537 = vmatprep.mubr.f32.mxu0 0.0
    %538 = vmatmul.mubr.f32.gmra.mrb[0].mxu0 %v249
    %v539 = vpop.f32.mrb[0].mxu0
    %v540 = vadd.f32 %v401, %v539
    %v541 = vpop.f32.mrb[0].mxu0
    %v542 = vadd.f32 %v405, %v541
    %543 = vmatprep.mubr.f32.mxu0 0.0
    %544 = vmatmul.mubr.f32.gmra.mrb[0].mxu0 %v250
    %v545 = vpop.f32.mrb[0].mxu0
    %v546 = vadd.f32 %v401, %v545
    %v547 = vpop.f32.mrb[0].mxu0
    %v548 = vadd.f32 %v405, %v547
    %549 = vmatprep.mubr.f32.mxu0 0.0
    %550 = vmatmul.mubr.f32.gmra.mrb[0].mxu0 %v251
    %v551 = vpop.f32.mrb[0].mxu0
    %v552 = vadd.f32 %v401, %v551
    %v553 = vpop.f32.mrb[0].mxu0
    %v554 = vadd.f32 %v405, %v553
    %555 = vdwg.mxu0
    %556 = vmatprep.subr.mxu0 %v255
    %557 = vmatpush1.msra.mxu0 %v254
    %558 = vmatprep.subr.mxu0 %v264
    %559 = vmatpush1.msra.mxu0 %v263
    %560 = vmatprep.subr.mxu0 %v273
    %561 = vmatpush1.msra.mxu0 %v272
    %562 = vmatprep.subr.mxu0 %v282
    %563 = vmatpush1.msra.mxu0 %v281
    %564 = vmatprep.subr.mxu0 %v291
    %565 = vmatpush1.msra.mxu0 %v290
    %566 = vmatprep.subr.mxu0 %v300
    %567 = vmatpush1.msra.mxu0 %v299
    %568 = vmatprep.subr.mxu0 %v309
    %569 = vmatpush1.msra.mxu0 %v308
    %570 = vmatprep.subr.mxu0 %v318
    %571 = vmatpush1.msra.mxu0 %v317
    %572 = vmatprep.subr.mxu0 %v327
    %573 = vmatpush1.msra.mxu0 %v326
    %574 = vmatprep.subr.mxu0 %v336
    %575 = vmatpush1.msra.mxu0 %v335
    %576 = vmatprep.subr.mxu0 %v345
    %577 = vmatpush1.msra.mxu0 %v344
    %578 = vmatprep.subr.mxu0 %v354
    %579 = vmatpush1.msra.mxu0 %v353
    %580 = vmatprep.subr.mxu0 %v363
    %581 = vmatpush1.msra.mxu0 %v362
    %582 = vmatprep.subr.mxu0 %v372
    %583 = vmatpush1.msra.mxu0 %v371
    %584 = vmatprep.subr.mxu0 %v381
    %585 = vmatpush1.msra.mxu0 %v380
    %586 = vmatprep.subr.mxu0 %v390
    %587 = vmatpush1.msra.mxu0 %v389
    %588 = vmatprep.subr.mxu0 0.0
    %589 = vmatpush1.msra.mxu0 0.0
    %590 = vmatprep.subr.mxu0 0.0
    %591 = vmatpush1.msra.mxu0 0.0
    %592 = vmatprep.subr.mxu0 0.0
    %593 = vmatpush1.msra.mxu0 0.0
    %594 = vmatprep.subr.mxu0 0.0
    %595 = vmatpush1.msra.mxu0 0.0
    %596 = vmatprep.subr.mxu0 0.0
    %597 = vmatpush1.msra.mxu0 0.0
    %598 = vmatprep.subr.mxu0 0.0
    %599 = vmatpush1.msra.mxu0 0.0
    %600 = vmatprep.subr.mxu0 0.0
    %601 = vmatpush1.msra.mxu0 0.0
    %602 = vmatprep.subr.mxu0 0.0
    %603 = vmatpush1.msra.mxu0 0.0
    %604 = vmatprep.subr.mxu0 0.0
    %605 = vmatpush1.msra.mxu0 0.0
    %606 = vmatprep.subr.mxu0 0.0
    %607 = vmatpush1.msra.mxu0 0.0
    %608 = vmatprep.subr.mxu0 0.0
    %609 = vmatpush1.msra.mxu0 0.0
    %610 = vmatprep.subr.mxu0 0.0
    %611 = vmatpush1.msra.mxu0 0.0
    %612 = vmatprep.subr.mxu0 0.0
    %613 = vmatpush1.msra.mxu0 0.0
    %614 = vmatprep.subr.mxu0 0.0
    %615 = vmatpush1.msra.mxu0 0.0
    %616 = vmatprep.subr.mxu0 0.0
    %617 = vmatpush1.msra.mxu0 0.0
    %618 = vmatprep.subr.mxu0 0.0
    %619 = vmatpush1.msra.mxu0 0.0
    %620 = vmatprep.mubr.f32.mxu0 0.0
    %621 = vmatmul.mubr.f32.gmra.mrb[0].mxu0 %v244
    %v622 = vpop.f32.mrb[0].mxu0
    %v623 = vadd.f32 %v409, %v622
    %v624 = vpop.f32.mrb[0].mxu0
    %v625 = vadd.f32 %v413, %v624
    %626 = vmatprep.mubr.f32.mxu0 0.0
    %627 = vmatmul.mubr.f32.gmra.mrb[0].mxu0 %v245
    %v628 = vpop.f32.mrb[0].mxu0
    %v629 = vadd.f32 %v409, %v628
    %v630 = vpop.f32.mrb[0].mxu0
    %v631 = vadd.f32 %v413, %v630
    %632 = vmatprep.mubr.f32.mxu0 0.0
    %633 = vmatmul.mubr.f32.gmra.mrb[0].mxu0 %v246
    %v634 = vpop.f32.mrb[0].mxu0
    %v635 = vadd.f32 %v409, %v634
    %v636 = vpop.f32.mrb[0].mxu0
    %v637 = vadd.f32 %v413, %v636
    %638 = vmatprep.mubr.f32.mxu0 0.0
    %639 = vmatmul.mubr.f32.gmra.mrb[0].mxu0 %v247
    %v640 = vpop.f32.mrb[0].mxu0
    %v641 = vadd.f32 %v409, %v640
    %v642 = vpop.f32.mrb[0].mxu0
    %v643 = vadd.f32 %v413, %v642
    %644 = vmatprep.mubr.f32.mxu0 0.0
    %645 = vmatmul.mubr.f32.gmra.mrb[0].mxu0 %v248
    %v646 = vpop.f32.mrb[0].mxu0
    %v647 = vadd.f32 %v409, %v646
    %v648 = vpop.f32.mrb[0].mxu0
    %v649 = vadd.f32 %v413, %v648
    %650 = vmatprep.mubr.f32.mxu0 0.0
    %651 = vmatmul.mubr.f32.gmra.mrb[0].mxu0 %v249
    %v652 = vpop.f32.mrb[0].mxu0
    %v653 = vadd.f32 %v409, %v652
    %v654 = vpop.f32.mrb[0].mxu0
    %v655 = vadd.f32 %v413, %v654
    %656 = vmatprep.mubr.f32.mxu0 0.0
    %657 = vmatmul.mubr.f32.gmra.mrb[0].mxu0 %v250
    %v658 = vpop.f32.mrb[0].mxu0
    %v659 = vadd.f32 %v409, %v658
    %v660 = vpop.f32.mrb[0].mxu0
    %v661 = vadd.f32 %v413, %v660
    %662 = vmatprep.mubr.f32.mxu0 0.0
    %663 = vmatmul.mubr.f32.gmra.mrb[0].mxu0 %v251
    %v664 = vpop.f32.mrb[0].mxu0
    %v665 = vadd.f32 %v409, %v664
    %v666 = vpop.f32.mrb[0].mxu0
    %v667 = vadd.f32 %v413, %v666
    %668 = vdwg.mxu0
    %669 = vmatprep.subr.mxu0 %v257
    %670 = vmatpush1.msra.mxu0 %v256
    %671 = vmatprep.subr.mxu0 %v266
    %672 = vmatpush1.msra.mxu0 %v265
    %673 = vmatprep.subr.mxu0 %v275
    %674 = vmatpush1.msra.mxu0 %v274
    %675 = vmatprep.subr.mxu0 %v284
    %676 = vmatpush1.msra.mxu0 %v283
    %677 = vmatprep.subr.mxu0 %v293
    %678 = vmatpush1.msra.mxu0 %v292
    %679 = vmatprep.subr.mxu0 %v302
    %680 = vmatpush1.msra.mxu0 %v301
    %681 = vmatprep.subr.mxu0 %v311
    %682 = vmatpush1.msra.mxu0 %v310
    %683 = vmatprep.subr.mxu0 %v320
    %684 = vmatpush1.msra.mxu0 %v319
    %685 = vmatprep.subr.mxu0 %v329
    %686 = vmatpush1.msra.mxu0 %v328
    %687 = vmatprep.subr.mxu0 %v338
    %688 = vmatpush1.msra.mxu0 %v337
    %689 = vmatprep.subr.mxu0 %v347
    %690 = vmatpush1.msra.mxu0 %v346
    %691 = vmatprep.subr.mxu0 %v356
    %692 = vmatpush1.msra.mxu0 %v355
    %693 = vmatprep.subr.mxu0 %v365
    %694 = vmatpush1.msra.mxu0 %v364
    %695 = vmatprep.subr.mxu0 %v374
    %696 = vmatpush1.msra.mxu0 %v373
    %697 = vmatprep.subr.mxu0 %v383
    %698 = vmatpush1.msra.mxu0 %v382
    %699 = vmatprep.subr.mxu0 %v392
    %700 = vmatpush1.msra.mxu0 %v391
    %701 = vmatprep.subr.mxu0 0.0
    %702 = vmatpush1.msra.mxu0 0.0
    %703 = vmatprep.subr.mxu0 0.0
    %704 = vmatpush1.msra.mxu0 0.0
    %705 = vmatprep.subr.mxu0 0.0
    %706 = vmatpush1.msra.mxu0 0.0
    %707 = vmatprep.subr.mxu0 0.0
    %708 = vmatpush1.msra.mxu0 0.0
    %709 = vmatprep.subr.mxu0 0.0
    %710 = vmatpush1.msra.mxu0 0.0
    %711 = vmatprep.subr.mxu0 0.0
    %712 = vmatpush1.msra.mxu0 0.0
    %713 = vmatprep.subr.mxu0 0.0
    %714 = vmatpush1.msra.mxu0 0.0
    %715 = vmatprep.subr.mxu0 0.0
    %716 = vmatpush1.msra.mxu0 0.0
    %717 = vmatprep.subr.mxu0 0.0
    %718 = vmatpush1.msra.mxu0 0.0
    %719 = vmatprep.subr.mxu0 0.0
    %720 = vmatpush1.msra.mxu0 0.0
    %721 = vmatprep.subr.mxu0 0.0
    %722 = vmatpush1.msra.mxu0 0.0
    %723 = vmatprep.subr.mxu0 0.0
    %724 = vmatpush1.msra.mxu0 0.0
    %725 = vmatprep.subr.mxu0 0.0
    %726 = vmatpush1.msra.mxu0 0.0
    %727 = vmatprep.subr.mxu0 0.0
    %728 = vmatpush1.msra.mxu0 0.0
    %729 = vmatprep.subr.mxu0 0.0
    %730 = vmatpush1.msra.mxu0 0.0
    %731 = vmatprep.subr.mxu0 0.0
    %732 = vmatpush1.msra.mxu0 0.0
    %733 = vmatprep.mubr.f32.mxu0 0.0
    %734 = vmatmul.mubr.f32.gmra.mrb[0].mxu0 %v244
    %v735 = vpop.f32.mrb[0].mxu0
    %v736 = vadd.f32 %v417, %v735
    %v737 = vpop.f32.mrb[0].mxu0
    %v738 = vadd.f32 %v421, %v737
    %739 = vmatprep.mubr.f32.mxu0 0.0
    %740 = vmatmul.mubr.f32.gmra.mrb[0].mxu0 %v245
    %v741 = vpop.f32.mrb[0].mxu0
    %v742 = vadd.f32 %v417, %v741
    %v743 = vpop.f32.mrb[0].mxu0
    %v744 = vadd.f32 %v421, %v743
    %745 = vmatprep.mubr.f32.mxu0 0.0
    %746 = vmatmul.mubr.f32.gmra.mrb[0].mxu0 %v246
    %v747 = vpop.f32.mrb[0].mxu0
    %v748 = vadd.f32 %v417, %v747
    %v749 = vpop.f32.mrb[0].mxu0
    %v750 = vadd.f32 %v421, %v749
    %751 = vmatprep.mubr.f32.mxu0 0.0
    %752 = vmatmul.mubr.f32.gmra.mrb[0].mxu0 %v247
    %v753 = vpop.f32.mrb[0].mxu0
    %v754 = vadd.f32 %v417, %v753
    %v755 = vpop.f32.mrb[0].mxu0
    %v756 = vadd.f32 %v421, %v755
    %757 = vmatprep.mubr.f32.mxu0 0.0
    %758 = vmatmul.mubr.f32.gmra.mrb[0].mxu0 %v248
    %v759 = vpop.f32.mrb[0].mxu0
    %v760 = vadd.f32 %v417, %v759
    %v761 = vpop.f32.mrb[0].mxu0
    %v762 = vadd.f32 %v421, %v761
    %763 = vmatprep.mubr.f32.mxu0 0.0
    %764 = vmatmul.mubr.f32.gmra.mrb[0].mxu0 %v249
    %v765 = vpop.f32.mrb[0].mxu0
    %v766 = vadd.f32 %v417, %v765
    %v767 = vpop.f32.mrb[0].mxu0
    %v768 = vadd.f32 %v421, %v767
    %769 = vmatprep.mubr.f32.mxu0 0.0
    %770 = vmatmul.mubr.f32.gmra.mrb[0].mxu0 %v250
    %v771 = vpop.f32.mrb[0].mxu0
    %v772 = vadd.f32 %v417, %v771
    %v773 = vpop.f32.mrb[0].mxu0
    %v774 = vadd.f32 %v421, %v773
    %775 = vmatprep.mubr.f32.mxu0 0.0
    %776 = vmatmul.mubr.f32.gmra.mrb[0].mxu0 %v251
    %v777 = vpop.f32.mrb[0].mxu0
    %v778 = vadd.f32 %v417, %v777
    %v779 = vpop.f32.mrb[0].mxu0
    %v780 = vadd.f32 %v421, %v779
    %781 = vdwg.mxu0
    %782 = vmatprep.subr.mxu0 %v259
    %783 = vmatpush1.msra.mxu0 %v258
    %784 = vmatprep.subr.mxu0 %v268
    %785 = vmatpush1.msra.mxu0 %v267
    %786 = vmatprep.subr.mxu0 %v277
    %787 = vmatpush1.msra.mxu0 %v276
    %788 = vmatprep.subr.mxu0 %v286
    %789 = vmatpush1.msra.mxu0 %v285
    %790 = vmatprep.subr.mxu0 %v295
    %791 = vmatpush1.msra.mxu0 %v294
    %792 = vmatprep.subr.mxu0 %v304
    %793 = vmatpush1.msra.mxu0 %v303
    %794 = vmatprep.subr.mxu0 %v313
    %795 = vmatpush1.msra.mxu0 %v312
    %796 = vmatprep.subr.mxu0 %v322
    %797 = vmatpush1.msra.mxu0 %v321
    %798 = vmatprep.subr.mxu0 %v331
    %799 = vmatpush1.msra.mxu0 %v330
    %800 = vmatprep.subr.mxu0 %v340
    %801 = vmatpush1.msra.mxu0 %v339
    %802 = vmatprep.subr.mxu0 %v349
    %803 = vmatpush1.msra.mxu0 %v348
    %804 = vmatprep.subr.mxu0 %v358
    %805 = vmatpush1.msra.mxu0 %v357
    %806 = vmatprep.subr.mxu0 %v367
    %807 = vmatpush1.msra.mxu0 %v366
    %808 = vmatprep.subr.mxu0 %v376
    %809 = vmatpush1.msra.mxu0 %v375
    %810 = vmatprep.subr.mxu0 %v385
    %811 = vmatpush1.msra.mxu0 %v384
    %812 = vmatprep.subr.mxu0 %v394
    %813 = vmatpush1.msra.mxu0 %v393
    %814 = vmatprep.subr.mxu0 0.0
    %815 = vmatpush1.msra.mxu0 0.0
    %816 = vmatprep.subr.mxu0 0.0
    %817 = vmatpush1.msra.mxu0 0.0
    %818 = vmatprep.subr.mxu0 0.0
    %819 = vmatpush1.msra.mxu0 0.0
    %820 = vmatprep.subr.mxu0 0.0
    %821 = vmatpush1.msra.mxu0 0.0
    %822 = vmatprep.subr.mxu0 0.0
    %823 = vmatpush1.msra.mxu0 0.0
    %824 = vmatprep.subr.mxu0 0.0
    %825 = vmatpush1.msra.mxu0 0.0
    %826 = vmatprep.subr.mxu0 0.0
    %827 = vmatpush1.msra.mxu0 0.0
    %828 = vmatprep.subr.mxu0 0.0
    %829 = vmatpush1.msra.mxu0 0.0
    %830 = vmatprep.subr.mxu0 0.0
    %831 = vmatpush1.msra.mxu0 0.0
    %832 = vmatprep.subr.mxu0 0.0
    %833 = vmatpush1.msra.mxu0 0.0
    %834 = vmatprep.subr.mxu0 0.0
    %835 = vmatpush1.msra.mxu0 0.0
    %836 = vmatprep.subr.mxu0 0.0
    %837 = vmatpush1.msra.mxu0 0.0
    %838 = vmatprep.subr.mxu0 0.0
    %839 = vmatpush1.msra.mxu0 0.0
    %840 = vmatprep.subr.mxu0 0.0
    %841 = vmatpush1.msra.mxu0 0.0
    %842 = vmatprep.subr.mxu0 0.0
    %843 = vmatpush1.msra.mxu0 0.0
    %844 = vmatprep.subr.mxu0 0.0
    %845 = vmatpush1.msra.mxu0 0.0
    %846 = vmatprep.mubr.f32.mxu0 0.0
    %847 = vmatmul.mubr.f32.gmra.mrb[0].mxu0 %v244
    %v848 = vpop.f32.mrb[0].mxu0
    %v849 = vadd.f32 %v425, %v848
    %v850 = vpop.f32.mrb[0].mxu0
    %v851 = vadd.f32 %v429, %v850
    %852 = vmatprep.mubr.f32.mxu0 0.0
    %853 = vmatmul.mubr.f32.gmra.mrb[0].mxu0 %v245
    %v854 = vpop.f32.mrb[0].mxu0
    %v855 = vadd.f32 %v425, %v854
    %v856 = vpop.f32.mrb[0].mxu0
    %v857 = vadd.f32 %v429, %v856
    %858 = vmatprep.mubr.f32.mxu0 0.0
    %859 = vmatmul.mubr.f32.gmra.mrb[0].mxu0 %v246
    %v860 = vpop.f32.mrb[0].mxu0
    %v861 = vadd.f32 %v425, %v860
    %v862 = vpop.f32.mrb[0].mxu0
    %v863 = vadd.f32 %v429, %v862
    %864 = vmatprep.mubr.f32.mxu0 0.0
    %865 = vmatmul.mubr.f32.gmra.mrb[0].mxu0 %v247
    %v866 = vpop.f32.mrb[0].mxu0
    %v867 = vadd.f32 %v425, %v866
    %v868 = vpop.f32.mrb[0].mxu0
    %v869 = vadd.f32 %v429, %v868
    %870 = vmatprep.mubr.f32.mxu0 0.0
    %871 = vmatmul.mubr.f32.gmra.mrb[0].mxu0 %v248
    %v872 = vpop.f32.mrb[0].mxu0
    %v873 = vadd.f32 %v425, %v872
    %v874 = vpop.f32.mrb[0].mxu0
    %v875 = vadd.f32 %v429, %v874
    %876 = vmatprep.mubr.f32.mxu0 0.0
    %877 = vmatmul.mubr.f32.gmra.mrb[0].mxu0 %v249
    %v878 = vpop.f32.mrb[0].mxu0
    %v879 = vadd.f32 %v425, %v878
    %v880 = vpop.f32.mrb[0].mxu0
    %v881 = vadd.f32 %v429, %v880
    %882 = vmatprep.mubr.f32.mxu0 0.0
    %883 = vmatmul.mubr.f32.gmra.mrb[0].mxu0 %v250
    %v884 = vpop.f32.mrb[0].mxu0
    %v885 = vadd.f32 %v425, %v884
    %v886 = vpop.f32.mrb[0].mxu0
    %v887 = vadd.f32 %v429, %v886
    %888 = vmatprep.mubr.f32.mxu0 0.0
    %889 = vmatmul.mubr.f32.gmra.mrb[0].mxu0 %v251
    %v890 = vpop.f32.mrb[0].mxu0
    %v891 = vadd.f32 %v425, %v890
    %v892 = vpop.f32.mrb[0].mxu0
    %v893 = vadd.f32 %v429, %v892
    %894 = vdwg.mxu0
    %895 = vmatprep.subr.mxu0 0.0
    %896 = vmatpush1.msra.mxu0 %v260
    %897 = vmatprep.subr.mxu0 0.0
    %898 = vmatpush1.msra.mxu0 %v269
    %899 = vmatprep.subr.mxu0 0.0
    %900 = vmatpush1.msra.mxu0 %v278
    %901 = vmatprep.subr.mxu0 0.0
    %902 = vmatpush1.msra.mxu0 %v287
    %903 = vmatprep.subr.mxu0 0.0
    %904 = vmatpush1.msra.mxu0 %v296
    %905 = vmatprep.subr.mxu0 0.0
    %906 = vmatpush1.msra.mxu0 %v305
    %907 = vmatprep.subr.mxu0 0.0
    %908 = vmatpush1.msra.mxu0 %v314
    %909 = vmatprep.subr.mxu0 0.0
    %910 = vmatpush1.msra.mxu0 %v323
    %911 = vmatprep.subr.mxu0 0.0
    %912 = vmatpush1.msra.mxu0 %v332
    %913 = vmatprep.subr.mxu0 0.0
    %914 = vmatpush1.msra.mxu0 %v341
    %915 = vmatprep.subr.mxu0 0.0
    %916 = vmatpush1.msra.mxu0 %v350
    %917 = vmatprep.subr.mxu0 0.0
    %918 = vmatpush1.msra.mxu0 %v359
    %919 = vmatprep.subr.mxu0 0.0
    %920 = vmatpush1.msra.mxu0 %v368
    %921 = vmatprep.subr.mxu0 0.0
    %922 = vmatpush1.msra.mxu0 %v377
    %923 = vmatprep.subr.mxu0 0.0
    %924 = vmatpush1.msra.mxu0 %v386
    %925 = vmatprep.subr.mxu0 0.0
    %926 = vmatpush1.msra.mxu0 %v395
    %927 = vmatprep.subr.mxu0 0.0
    %928 = vmatpush1.msra.mxu0 0.0
    %929 = vmatprep.subr.mxu0 0.0
    %930 = vmatpush1.msra.mxu0 0.0
    %931 = vmatprep.subr.mxu0 0.0
    %932 = vmatpush1.msra.mxu0 0.0
    %933 = vmatprep.subr.mxu0 0.0
    %934 = vmatpush1.msra.mxu0 0.0
    %935 = vmatprep.subr.mxu0 0.0
    %936 = vmatpush1.msra.mxu0 0.0
    %937 = vmatprep.subr.mxu0 0.0
    %938 = vmatpush1.msra.mxu0 0.0
    %939 = vmatprep.subr.mxu0 0.0
    %940 = vmatpush1.msra.mxu0 0.0
    %941 = vmatprep.subr.mxu0 0.0
    %942 = vmatpush1.msra.mxu0 0.0
    %943 = vmatprep.subr.mxu0 0.0
    %944 = vmatpush1.msra.mxu0 0.0
    %945 = vmatprep.subr.mxu0 0.0
    %946 = vmatpush1.msra.mxu0 0.0
    %947 = vmatprep.subr.mxu0 0.0
    %948 = vmatpush1.msra.mxu0 0.0
    %949 = vmatprep.subr.mxu0 0.0
    %950 = vmatpush1.msra.mxu0 0.0
    %951 = vmatprep.subr.mxu0 0.0
    %952 = vmatpush1.msra.mxu0 0.0
    %953 = vmatprep.subr.mxu0 0.0
    %954 = vmatpush1.msra.mxu0 0.0
    %955 = vmatprep.subr.mxu0 0.0
    %956 = vmatpush1.msra.mxu0 0.0
    %957 = vmatprep.subr.mxu0 0.0
    %958 = vmatpush1.msra.mxu0 0.0
    %959 = vmatprep.mubr.f32.mxu0 0.0
    %960 = vmatmul.mubr.f32.gmra.mrb[0].mxu0 %v244
    %v961 = vpop.f32.mrb[0].mxu0
    %v962 = vadd.f32 %v433, %v961
    %v963 = vpop.f32.mrb[0].mxu0
    %964 = vmatprep.mubr.f32.mxu0 0.0
    %965 = vmatmul.mubr.f32.gmra.mrb[0].mxu0 %v245
    %v966 = vpop.f32.mrb[0].mxu0
    %v967 = vadd.f32 %v433, %v966
    %v968 = vpop.f32.mrb[0].mxu0
    %969 = vmatprep.mubr.f32.mxu0 0.0
    %970 = vmatmul.mubr.f32.gmra.mrb[0].mxu0 %v246
    %v971 = vpop.f32.mrb[0].mxu0
    %v972 = vadd.f32 %v433, %v971
    %v973 = vpop.f32.mrb[0].mxu0
    %974 = vmatprep.mubr.f32.mxu0 0.0
    %975 = vmatmul.mubr.f32.gmra.mrb[0].mxu0 %v247
    %v976 = vpop.f32.mrb[0].mxu0
    %v977 = vadd.f32 %v433, %v976
    %v978 = vpop.f32.mrb[0].mxu0
    %979 = vmatprep.mubr.f32.mxu0 0.0
    %980 = vmatmul.mubr.f32.gmra.mrb[0].mxu0 %v248
    %v981 = vpop.f32.mrb[0].mxu0
    %v982 = vadd.f32 %v433, %v981
    %v983 = vpop.f32.mrb[0].mxu0
    %984 = vmatprep.mubr.f32.mxu0 0.0
    %985 = vmatmul.mubr.f32.gmra.mrb[0].mxu0 %v249
    %v986 = vpop.f32.mrb[0].mxu0
    %v987 = vadd.f32 %v433, %v986
    %v988 = vpop.f32.mrb[0].mxu0
    %989 = vmatprep.mubr.f32.mxu0 0.0
    %990 = vmatmul.mubr.f32.gmra.mrb[0].mxu0 %v250
    %v991 = vpop.f32.mrb[0].mxu0
    %v992 = vadd.f32 %v433, %v991
    %v993 = vpop.f32.mrb[0].mxu0
    %994 = vmatprep.mubr.f32.mxu0 0.0
    %995 = vmatmul.mubr.f32.gmra.mrb[0].mxu0 %v251
    %v996 = vpop.f32.mrb[0].mxu0
    %v997 = vadd.f32 %v433, %v996
    %v998 = vpop.f32.mrb[0].mxu0
    %999 = vdwg.mxu0
    %v1000 = vmax.f32 %v510, 0.0
    %v1001 = vmax.f32 %v512, 0.0
    %v1002 = vmax.f32 %v623, 0.0
    %v1003 = vmax.f32 %v625, 0.0
    %v1004 = vmax.f32 %v736, 0.0
    %v1005 = vmax.f32 %v738, 0.0
    %v1006 = vmax.f32 %v849, 0.0
    %v1007 = vmax.f32 %v851, 0.0
    %v1008 = vmax.f32 %v962, 0.0
    %v1009 = vmax.f32 %v516, 0.0
    %v1010 = vmax.f32 %v518, 0.0
    %v1011 = vmax.f32 %v629, 0.0
    %v1012 = vmax.f32 %v631, 0.0
    %v1013 = vmax.f32 %v742, 0.0
    %v1014 = vmax.f32 %v744, 0.0
    %v1015 = vmax.f32 %v855, 0.0
    %v1016 = vmax.f32 %v857, 0.0
    %v1017 = vmax.f32 %v967, 0.0
    %v1018 = vmax.f32 %v522, 0.0
    %v1019 = vmax.f32 %v524, 0.0
    %v1020 = vmax.f32 %v635, 0.0
    %v1021 = vmax.f32 %v637, 0.0
    %v1022 = vmax.f32 %v748, 0.0
    %v1023 = vmax.f32 %v750, 0.0
    %v1024 = vmax.f32 %v861, 0.0
    %v1025 = vmax.f32 %v863, 0.0
    %v1026 = vmax.f32 %v972, 0.0
    %v1027 = vmax.f32 %v528, 0.0
    %v1028 = vmax.f32 %v530, 0.0
    %v1029 = vmax.f32 %v641, 0.0
    %v1030 = vmax.f32 %v643, 0.0
    %v1031 = vmax.f32 %v754, 0.0
    %v1032 = vmax.f32 %v756, 0.0
    %v1033 = vmax.f32 %v867, 0.0
    %v1034 = vmax.f32 %v869, 0.0
    %v1035 = vmax.f32 %v977, 0.0
    %v1036 = vmax.f32 %v534, 0.0
    %v1037 = vmax.f32 %v536, 0.0
    %v1038 = vmax.f32 %v647, 0.0
    %v1039 = vmax.f32 %v649, 0.0
    %v1040 = vmax.f32 %v760, 0.0
    %v1041 = vmax.f32 %v762, 0.0
    %v1042 = vmax.f32 %v873, 0.0
    %v1043 = vmax.f32 %v875, 0.0
    %v1044 = vmax.f32 %v982, 0.0
    %v1045 = vmax.f32 %v540, 0.0
    %v1046 = vmax.f32 %v542, 0.0
    %v1047 = vmax.f32 %v653, 0.0
    %v1048 = vmax.f32 %v655, 0.0
    %v1049 = vmax.f32 %v766, 0.0
    %v1050 = vmax.f32 %v768, 0.0
    %v1051 = vmax.f32 %v879, 0.0
    %v1052 = vmax.f32 %v881, 0.0
    %v1053 = vmax.f32 %v987, 0.0
    %v1054 = vmax.f32 %v546, 0.0
    %v1055 = vmax.f32 %v548, 0.0
    %v1056 = vmax.f32 %v659, 0.0
    %v1057 = vmax.f32 %v661, 0.0
    %v1058 = vmax.f32 %v772, 0.0
    %v1059 = vmax.f32 %v774, 0.0
    %v1060 = vmax.f32 %v885, 0.0
    %v1061 = vmax.f32 %v887, 0.0
    %v1062 = vmax.f32 %v992, 0.0
    %v1063 = vmax.f32 %v552, 0.0
    %v1064 = vmax.f32 %v554, 0.0
    %v1065 = vmax.f32 %v665, 0.0
    %v1066 = vmax.f32 %v667, 0.0
    %v1067 = vmax.f32 %v778, 0.0
    %v1068 = vmax.f32 %v780, 0.0
    %v1069 = vmax.f32 %v891, 0.0
    %v1070 = vmax.f32 %v893, 0.0
    %v1071 = vmax.f32 %v997, 0.0
    %v1072 = vmul.f32 %v1000, %v1003
    %v1073 = vmul.f32 %v1009, %v1012
    %v1074 = vmul.f32 %v1018, %v1021
    %v1075 = vmul.f32 %v1027, %v1030
    %v1076 = vmul.f32 %v1036, %v1039
    %v1077 = vmul.f32 %v1045, %v1048
    %v1078 = vmul.f32 %v1054, %v1057
    %v1079 = vmul.f32 %v1063, %v1066
    %1080 = vadd.xlane.f32.xlu0 %v1072
    %v1081 = vpop.xlane.xlu0 %1080
    %1082 = vadd.xlane.f32.xlu0 %v1073
    %v1083 = vpop.xlane.xlu0 %1082
    %1084 = vadd.xlane.f32.xlu0 %v1074
    %v1085 = vpop.xlane.xlu0 %1084
    %1086 = vadd.xlane.f32.xlu0 %v1075
    %v1087 = vpop.xlane.xlu0 %1086
    %1088 = vadd.xlane.f32.xlu0 %v1076
    %v1089 = vpop.xlane.xlu0 %1088
    %1090 = vadd.xlane.f32.xlu0 %v1077
    %v1091 = vpop.xlane.xlu0 %1090
    %1092 = vadd.xlane.f32.xlu0 %v1078
    %v1093 = vpop.xlane.xlu0 %1092
    %1094 = vadd.xlane.f32.xlu0 %v1079
    %v1095 = vpop.xlane.xlu0 %1094
    %v1096 = vmul.f32 %v1000, %v1004
    %v1097 = vmul.f32 %v1009, %v1013
    %v1098 = vmul.f32 %v1018, %v1022
    %v1099 = vmul.f32 %v1027, %v1031
    %v1100 = vmul.f32 %v1036, %v1040
    %v1101 = vmul.f32 %v1045, %v1049
    %v1102 = vmul.f32 %v1054, %v1058
    %v1103 = vmul.f32 %v1063, %v1067
    %1104 = vadd.xlane.f32.xlu0 %v1096
    %v1105 = vpop.xlane.xlu0 %1104
    %1106 = vadd.xlane.f32.xlu0 %v1097
    %v1107 = vpop.xlane.xlu0 %1106
    %1108 = vadd.xlane.f32.xlu0 %v1098
    %v1109 = vpop.xlane.xlu0 %1108
    %1110 = vadd.xlane.f32.xlu0 %v1099
    %v1111 = vpop.xlane.xlu0 %1110
    %1112 = vadd.xlane.f32.xlu0 %v1100
    %v1113 = vpop.xlane.xlu0 %1112
    %1114 = vadd.xlane.f32.xlu0 %v1101
    %v1115 = vpop.xlane.xlu0 %1114
    %1116 = vadd.xlane.f32.xlu0 %v1102
    %v1117 = vpop.xlane.xlu0 %1116
    %1118 = vadd.xlane.f32.xlu0 %v1103
    %v1119 = vpop.xlane.xlu0 %1118
    %v1120 = vmul.f32 %v1000, %v1005
    %v1121 = vmul.f32 %v1009, %v1014
    %v1122 = vmul.f32 %v1018, %v1023
    %v1123 = vmul.f32 %v1027, %v1032
    %v1124 = vmul.f32 %v1036, %v1041
    %v1125 = vmul.f32 %v1045, %v1050
    %v1126 = vmul.f32 %v1054, %v1059
    %v1127 = vmul.f32 %v1063, %v1068
    %1128 = vadd.xlane.f32.xlu0 %v1120
    %v1129 = vpop.xlane.xlu0 %1128
    %1130 = vadd.xlane.f32.xlu0 %v1121
    %v1131 = vpop.xlane.xlu0 %1130
    %1132 = vadd.xlane.f32.xlu0 %v1122
    %v1133 = vpop.xlane.xlu0 %1132
    %1134 = vadd.xlane.f32.xlu0 %v1123
    %v1135 = vpop.xlane.xlu0 %1134
    %1136 = vadd.xlane.f32.xlu0 %v1124
    %v1137 = vpop.xlane.xlu0 %1136
    %1138 = vadd.xlane.f32.xlu0 %v1125
    %v1139 = vpop.xlane.xlu0 %1138
    %1140 = vadd.xlane.f32.xlu0 %v1126
    %v1141 = vpop.xlane.xlu0 %1140
    %1142 = vadd.xlane.f32.xlu0 %v1127
    %v1143 = vpop.xlane.xlu0 %1142
    %v1144 = vmax.f32 %v1081, %v1105
    %v1145 = vmax.f32 %v1083, %v1107
    %v1146 = vmax.f32 %v1085, %v1109
    %v1147 = vmax.f32 %v1087, %v1111
    %v1148 = vmax.f32 %v1089, %v1113
    %v1149 = vmax.f32 %v1091, %v1115
    %v1150 = vmax.f32 %v1093, %v1117
    %v1151 = vmax.f32 %v1095, %v1119
    %v1152 = vmax.f32 %v1144, %v1129
    %v1153 = vmax.f32 %v1145, %v1131
    %v1154 = vmax.f32 %v1146, %v1133
    %v1155 = vmax.f32 %v1147, %v1135
    %v1156 = vmax.f32 %v1148, %v1137
    %v1157 = vmax.f32 %v1149, %v1139
    %v1158 = vmax.f32 %v1150, %v1141
    %v1159 = vmax.f32 %v1151, %v1143
    %v1160 = vsub.f32 %v1081, %v1152
    %v1161 = vsub.f32 %v1083, %v1153
    %v1162 = vsub.f32 %v1085, %v1154
    %v1163 = vsub.f32 %v1087, %v1155
    %v1164 = vsub.f32 %v1089, %v1156
    %v1165 = vsub.f32 %v1091, %v1157
    %v1166 = vsub.f32 %v1093, %v1158
    %v1167 = vsub.f32 %v1095, %v1159
    %v1168 = vmul.f32 %v1160, 1.442695
    %v1169 = vpow.pop %v1168
    %v1170 = vmul.f32 %v1161, 1.442695
    %v1171 = vpow.pop %v1170
    %v1172 = vmul.f32 %v1162, 1.442695
    %v1173 = vpow.pop %v1172
    %v1174 = vmul.f32 %v1163, 1.442695
    %v1175 = vpow.pop %v1174
    %v1176 = vmul.f32 %v1164, 1.442695
    %v1177 = vpow.pop %v1176
    %v1178 = vmul.f32 %v1165, 1.442695
    %v1179 = vpow.pop %v1178
    %v1180 = vmul.f32 %v1166, 1.442695
    %v1181 = vpow.pop %v1180
    %v1182 = vmul.f32 %v1167, 1.442695
    %v1183 = vpow.pop %v1182
    %v1184 = vsub.f32 %v1105, %v1152
    %v1185 = vsub.f32 %v1107, %v1153
    %v1186 = vsub.f32 %v1109, %v1154
    %v1187 = vsub.f32 %v1111, %v1155
    %v1188 = vsub.f32 %v1113, %v1156
    %v1189 = vsub.f32 %v1115, %v1157
    %v1190 = vsub.f32 %v1117, %v1158
    %v1191 = vsub.f32 %v1119, %v1159
    %v1192 = vmul.f32 %v1184, 1.442695
    %v1193 = vpow.pop %v1192
    %v1194 = vmul.f32 %v1185, 1.442695
    %v1195 = vpow.pop %v1194
    %v1196 = vmul.f32 %v1186, 1.442695
    %v1197 = vpow.pop %v1196
    %v1198 = vmul.f32 %v1187, 1.442695
    %v1199 = vpow.pop %v1198
    %v1200 = vmul.f32 %v1188, 1.442695
    %v1201 = vpow.pop %v1200
    %v1202 = vmul.f32 %v1189, 1.442695
    %v1203 = vpow.pop %v1202
    %v1204 = vmul.f32 %v1190, 1.442695
    %v1205 = vpow.pop %v1204
    %v1206 = vmul.f32 %v1191, 1.442695
    %v1207 = vpow.pop %v1206
    %v1208 = vsub.f32 %v1129, %v1152
    %v1209 = vsub.f32 %v1131, %v1153
    %v1210 = vsub.f32 %v1133, %v1154
    %v1211 = vsub.f32 %v1135, %v1155
    %v1212 = vsub.f32 %v1137, %v1156
    %v1213 = vsub.f32 %v1139, %v1157
    %v1214 = vsub.f32 %v1141, %v1158
    %v1215 = vsub.f32 %v1143, %v1159
    %v1216 = vmul.f32 %v1208, 1.442695
    %v1217 = vpow.pop %v1216
    %v1218 = vmul.f32 %v1209, 1.442695
    %v1219 = vpow.pop %v1218
    %v1220 = vmul.f32 %v1210, 1.442695
    %v1221 = vpow.pop %v1220
    %v1222 = vmul.f32 %v1211, 1.442695
    %v1223 = vpow.pop %v1222
    %v1224 = vmul.f32 %v1212, 1.442695
    %v1225 = vpow.pop %v1224
    %v1226 = vmul.f32 %v1213, 1.442695
    %v1227 = vpow.pop %v1226
    %v1228 = vmul.f32 %v1214, 1.442695
    %v1229 = vpow.pop %v1228
    %v1230 = vmul.f32 %v1215, 1.442695
    %v1231 = vpow.pop %v1230
    %v1232 = vadd.f32 %v1169, %v1193
    %v1233 = vadd.f32 %v1171, %v1195
    %v1234 = vadd.f32 %v1173, %v1197
    %v1235 = vadd.f32 %v1175, %v1199
    %v1236 = vadd.f32 %v1177, %v1201
    %v1237 = vadd.f32 %v1179, %v1203
    %v1238 = vadd.f32 %v1181, %v1205
    %v1239 = vadd.f32 %v1183, %v1207
    %v1240 = vadd.f32 %v1232, %v1217
    %v1241 = vadd.f32 %v1233, %v1219
    %v1242 = vadd.f32 %v1234, %v1221
    %v1243 = vadd.f32 %v1235, %v1223
    %v1244 = vadd.f32 %v1236, %v1225
    %v1245 = vadd.f32 %v1237, %v1227
    %v1246 = vadd.f32 %v1238, %v1229
    %v1247 = vadd.f32 %v1239, %v1231
    %v1248 = vrcp.pop %v1240
    %v1249 = vrcp.pop %v1241
    %v1250 = vrcp.pop %v1242
    %v1251 = vrcp.pop %v1243
    %v1252 = vrcp.pop %v1244
    %v1253 = vrcp.pop %v1245
    %v1254 = vrcp.pop %v1246
    %v1255 = vrcp.pop %v1247
    %v1256 = vmul.f32 %v1169, %v1006
    %v1257 = vmul.f32 %v1171, %v1015
    %v1258 = vmul.f32 %v1173, %v1024
    %v1259 = vmul.f32 %v1175, %v1033
    %v1260 = vmul.f32 %v1177, %v1042
    %v1261 = vmul.f32 %v1179, %v1051
    %v1262 = vmul.f32 %v1181, %v1060
    %v1263 = vmul.f32 %v1183, %v1069
    %v1264 = vmul.f32 %v1193, %v1007
    %v1265 = vmul.f32 %v1195, %v1016
    %v1266 = vmul.f32 %v1197, %v1025
    %v1267 = vmul.f32 %v1199, %v1034
    %v1268 = vmul.f32 %v1201, %v1043
    %v1269 = vmul.f32 %v1203, %v1052
    %v1270 = vmul.f32 %v1205, %v1061
    %v1271 = vmul.f32 %v1207, %v1070
    %v1272 = vadd.f32 %v1256, %v1264
    %v1273 = vadd.f32 %v1257, %v1265
    %v1274 = vadd.f32 %v1258, %v1266
    %v1275 = vadd.f32 %v1259, %v1267
    %v1276 = vadd.f32 %v1260, %v1268
    %v1277 = vadd.f32 %v1261, %v1269
    %v1278 = vadd.f32 %v1262, %v1270
    %v1279 = vadd.f32 %v1263, %v1271
    %v1280 = vmul.f32 %v1217, %v1008
    %v1281 = vmul.f32 %v1219, %v1017
    %v1282 = vmul.f32 %v1221, %v1026
    %v1283 = vmul.f32 %v1223, %v1035
    %v1284 = vmul.f32 %v1225, %v1044
    %v1285 = vmul.f32 %v1227, %v1053
    %v1286 = vmul.f32 %v1229, %v1062
    %v1287 = vmul.f32 %v1231, %v1071
    %v1288 = vadd.f32 %v1272, %v1280
    %v1289 = vadd.f32 %v1273, %v1281
    %v1290 = vadd.f32 %v1274, %v1282
    %v1291 = vadd.f32 %v1275, %v1283
    %v1292 = vadd.f32 %v1276, %v1284
    %v1293 = vadd.f32 %v1277, %v1285
    %v1294 = vadd.f32 %v1278, %v1286
    %v1295 = vadd.f32 %v1279, %v1287
    %v1296 = vmul.f32 %v1288, %v1248
    %v1297 = vmul.f32 %v1289, %v1249
    %v1298 = vmul.f32 %v1290, %v1250
    %v1299 = vmul.f32 %v1291, %v1251
    %v1300 = vmul.f32 %v1292, %v1252
    %v1301 = vmul.f32 %v1293, %v1253
    %v1302 = vmul.f32 %v1294, %v1254
    %v1303 = vmul.f32 %v1295, %v1255
    %v1304 = vmul.f32 %v1001, %v1003
    %v1305 = vmul.f32 %v1010, %v1012
    %v1306 = vmul.f32 %v1019, %v1021
    %v1307 = vmul.f32 %v1028, %v1030
    %v1308 = vmul.f32 %v1037, %v1039
    %v1309 = vmul.f32 %v1046, %v1048
    %v1310 = vmul.f32 %v1055, %v1057
    %v1311 = vmul.f32 %v1064, %v1066
    %1312 = vadd.xlane.f32.xlu0 %v1304
    %v1313 = vpop.xlane.xlu0 %1312
    %1314 = vadd.xlane.f32.xlu0 %v1305
    %v1315 = vpop.xlane.xlu0 %1314
    %1316 = vadd.xlane.f32.xlu0 %v1306
    %v1317 = vpop.xlane.xlu0 %1316
    %1318 = vadd.xlane.f32.xlu0 %v1307
    %v1319 = vpop.xlane.xlu0 %1318
    %1320 = vadd.xlane.f32.xlu0 %v1308
    %v1321 = vpop.xlane.xlu0 %1320
    %1322 = vadd.xlane.f32.xlu0 %v1309
    %v1323 = vpop.xlane.xlu0 %1322
    %1324 = vadd.xlane.f32.xlu0 %v1310
    %v1325 = vpop.xlane.xlu0 %1324
    %1326 = vadd.xlane.f32.xlu0 %v1311
    %v1327 = vpop.xlane.xlu0 %1326
    %v1328 = vmul.f32 %v1001, %v1004
    %v1329 = vmul.f32 %v1010, %v1013
    %v1330 = vmul.f32 %v1019, %v1022
    %v1331 = vmul.f32 %v1028, %v1031
    %v1332 = vmul.f32 %v1037, %v1040
    %v1333 = vmul.f32 %v1046, %v1049
    %v1334 = vmul.f32 %v1055, %v1058
    %v1335 = vmul.f32 %v1064, %v1067
    %1336 = vadd.xlane.f32.xlu0 %v1328
    %v1337 = vpop.xlane.xlu0 %1336
    %1338 = vadd.xlane.f32.xlu0 %v1329
    %v1339 = vpop.xlane.xlu0 %1338
    %1340 = vadd.xlane.f32.xlu0 %v1330
    %v1341 = vpop.xlane.xlu0 %1340
    %1342 = vadd.xlane.f32.xlu0 %v1331
    %v1343 = vpop.xlane.xlu0 %1342
    %1344 = vadd.xlane.f32.xlu0 %v1332
    %v1345 = vpop.xlane.xlu0 %1344
    %1346 = vadd.xlane.f32.xlu0 %v1333
    %v1347 = vpop.xlane.xlu0 %1346
    %1348 = vadd.xlane.f32.xlu0 %v1334
    %v1349 = vpop.xlane.xlu0 %1348
    %1350 = vadd.xlane.f32.xlu0 %v1335
    %v1351 = vpop.xlane.xlu0 %1350
    %v1352 = vmul.f32 %v1001, %v1005
    %v1353 = vmul.f32 %v1010, %v1014
    %v1354 = vmul.f32 %v1019, %v1023
    %v1355 = vmul.f32 %v1028, %v1032
    %v1356 = vmul.f32 %v1037, %v1041
    %v1357 = vmul.f32 %v1046, %v1050
    %v1358 = vmul.f32 %v1055, %v1059
    %v1359 = vmul.f32 %v1064, %v1068
    %1360 = vadd.xlane.f32.xlu0 %v1352
    %v1361 = vpop.xlane.xlu0 %1360
    %1362 = vadd.xlane.f32.xlu0 %v1353
    %v1363 = vpop.xlane.xlu0 %1362
    %1364 = vadd.xlane.f32.xlu0 %v1354
    %v1365 = vpop.xlane.xlu0 %1364
    %1366 = vadd.xlane.f32.xlu0 %v1355
    %v1367 = vpop.xlane.xlu0 %1366
    %1368 = vadd.xlane.f32.xlu0 %v1356
    %v1369 = vpop.xlane.xlu0 %1368
    %1370 = vadd.xlane.f32.xlu0 %v1357
    %v1371 = vpop.xlane.xlu0 %1370
    %1372 = vadd.xlane.f32.xlu0 %v1358
    %v1373 = vpop.xlane.xlu0 %1372
    %1374 = vadd.xlane.f32.xlu0 %v1359
    %v1375 = vpop.xlane.xlu0 %1374
    %v1376 = vmax.f32 %v1313, %v1337
    %v1377 = vmax.f32 %v1315, %v1339
    %v1378 = vmax.f32 %v1317, %v1341
    %v1379 = vmax.f32 %v1319, %v1343
    %v1380 = vmax.f32 %v1321, %v1345
    %v1381 = vmax.f32 %v1323, %v1347
    %v1382 = vmax.f32 %v1325, %v1349
    %v1383 = vmax.f32 %v1327, %v1351
    %v1384 = vmax.f32 %v1376, %v1361
    %v1385 = vmax.f32 %v1377, %v1363
    %v1386 = vmax.f32 %v1378, %v1365
    %v1387 = vmax.f32 %v1379, %v1367
    %v1388 = vmax.f32 %v1380, %v1369
    %v1389 = vmax.f32 %v1381, %v1371
    %v1390 = vmax.f32 %v1382, %v1373
    %v1391 = vmax.f32 %v1383, %v1375
    %v1392 = vsub.f32 %v1313, %v1384
    %v1393 = vsub.f32 %v1315, %v1385
    %v1394 = vsub.f32 %v1317, %v1386
    %v1395 = vsub.f32 %v1319, %v1387
    %v1396 = vsub.f32 %v1321, %v1388
    %v1397 = vsub.f32 %v1323, %v1389
    %v1398 = vsub.f32 %v1325, %v1390
    %v1399 = vsub.f32 %v1327, %v1391
    %v1400 = vmul.f32 %v1392, 1.442695
    %v1401 = vpow.pop %v1400
    %v1402 = vmul.f32 %v1393, 1.442695
    %v1403 = vpow.pop %v1402
    %v1404 = vmul.f32 %v1394, 1.442695
    %v1405 = vpow.pop %v1404
    %v1406 = vmul.f32 %v1395, 1.442695
    %v1407 = vpow.pop %v1406
    %v1408 = vmul.f32 %v1396, 1.442695
    %v1409 = vpow.pop %v1408
    %v1410 = vmul.f32 %v1397, 1.442695
    %v1411 = vpow.pop %v1410
    %v1412 = vmul.f32 %v1398, 1.442695
    %v1413 = vpow.pop %v1412
    %v1414 = vmul.f32 %v1399, 1.442695
    %v1415 = vpow.pop %v1414
    %v1416 = vsub.f32 %v1337, %v1384
    %v1417 = vsub.f32 %v1339, %v1385
    %v1418 = vsub.f32 %v1341, %v1386
    %v1419 = vsub.f32 %v1343, %v1387
    %v1420 = vsub.f32 %v1345, %v1388
    %v1421 = vsub.f32 %v1347, %v1389
    %v1422 = vsub.f32 %v1349, %v1390
    %v1423 = vsub.f32 %v1351, %v1391
    %v1424 = vmul.f32 %v1416, 1.442695
    %v1425 = vpow.pop %v1424
    %v1426 = vmul.f32 %v1417, 1.442695
    %v1427 = vpow.pop %v1426
    %v1428 = vmul.f32 %v1418, 1.442695
    %v1429 = vpow.pop %v1428
    %v1430 = vmul.f32 %v1419, 1.442695
    %v1431 = vpow.pop %v1430
    %v1432 = vmul.f32 %v1420, 1.442695
    %v1433 = vpow.pop %v1432
    %v1434 = vmul.f32 %v1421, 1.442695
    %v1435 = vpow.pop %v1434
    %v1436 = vmul.f32 %v1422, 1.442695
    %v1437 = vpow.pop %v1436
    %v1438 = vmul.f32 %v1423, 1.442695
    %v1439 = vpow.pop %v1438
    %v1440 = vsub.f32 %v1361, %v1384
    %v1441 = vsub.f32 %v1363, %v1385
    %v1442 = vsub.f32 %v1365, %v1386
    %v1443 = vsub.f32 %v1367, %v1387
    %v1444 = vsub.f32 %v1369, %v1388
    %v1445 = vsub.f32 %v1371, %v1389
    %v1446 = vsub.f32 %v1373, %v1390
    %v1447 = vsub.f32 %v1375, %v1391
    %v1448 = vmul.f32 %v1440, 1.442695
    %v1449 = vpow.pop %v1448
    %v1450 = vmul.f32 %v1441, 1.442695
    %v1451 = vpow.pop %v1450
    %v1452 = vmul.f32 %v1442, 1.442695
    %v1453 = vpow.pop %v1452
    %v1454 = vmul.f32 %v1443, 1.442695
    %v1455 = vpow.pop %v1454
    %v1456 = vmul.f32 %v1444, 1.442695
    %v1457 = vpow.pop %v1456
    %v1458 = vmul.f32 %v1445, 1.442695
    %v1459 = vpow.pop %v1458
    %v1460 = vmul.f32 %v1446, 1.442695
    %v1461 = vpow.pop %v1460
    %v1462 = vmul.f32 %v1447, 1.442695
    %v1463 = vpow.pop %v1462
    %v1464 = vadd.f32 %v1401, %v1425
    %v1465 = vadd.f32 %v1403, %v1427
    %v1466 = vadd.f32 %v1405, %v1429
    %v1467 = vadd.f32 %v1407, %v1431
    %v1468 = vadd.f32 %v1409, %v1433
    %v1469 = vadd.f32 %v1411, %v1435
    %v1470 = vadd.f32 %v1413, %v1437
    %v1471 = vadd.f32 %v1415, %v1439
    %v1472 = vadd.f32 %v1464, %v1449
    %v1473 = vadd.f32 %v1465, %v1451
    %v1474 = vadd.f32 %v1466, %v1453
    %v1475 = vadd.f32 %v1467, %v1455
    %v1476 = vadd.f32 %v1468, %v1457
    %v1477 = vadd.f32 %v1469, %v1459
    %v1478 = vadd.f32 %v1470, %v1461
    %v1479 = vadd.f32 %v1471, %v1463
    %v1480 = vrcp.pop %v1472
    %v1481 = vrcp.pop %v1473
    %v1482 = vrcp.pop %v1474
    %v1483 = vrcp.pop %v1475
    %v1484 = vrcp.pop %v1476
    %v1485 = vrcp.pop %v1477
    %v1486 = vrcp.pop %v1478
    %v1487 = vrcp.pop %v1479
    %v1488 = vmul.f32 %v1401, %v1006
    %v1489 = vmul.f32 %v1403, %v1015
    %v1490 = vmul.f32 %v1405, %v1024
    %v1491 = vmul.f32 %v1407, %v1033
    %v1492 = vmul.f32 %v1409, %v1042
    %v1493 = vmul.f32 %v1411, %v1051
    %v1494 = vmul.f32 %v1413, %v1060
    %v1495 = vmul.f32 %v1415, %v1069
    %v1496 = vmul.f32 %v1425, %v1007
    %v1497 = vmul.f32 %v1427, %v1016
    %v1498 = vmul.f32 %v1429, %v1025
    %v1499 = vmul.f32 %v1431, %v1034
    %v1500 = vmul.f32 %v1433, %v1043
    %v1501 = vmul.f32 %v1435, %v1052
    %v1502 = vmul.f32 %v1437, %v1061
    %v1503 = vmul.f32 %v1439, %v1070
    %v1504 = vadd.f32 %v1488, %v1496
    %v1505 = vadd.f32 %v1489, %v1497
    %v1506 = vadd.f32 %v1490, %v1498
    %v1507 = vadd.f32 %v1491, %v1499
    %v1508 = vadd.f32 %v1492, %v1500
    %v1509 = vadd.f32 %v1493, %v1501
    %v1510 = vadd.f32 %v1494, %v1502
    %v1511 = vadd.f32 %v1495, %v1503
    %v1512 = vmul.f32 %v1449, %v1008
    %v1513 = vmul.f32 %v1451, %v1017
    %v1514 = vmul.f32 %v1453, %v1026
    %v1515 = vmul.f32 %v1455, %v1035
    %v1516 = vmul.f32 %v1457, %v1044
    %v1517 = vmul.f32 %v1459, %v1053
    %v1518 = vmul.f32 %v1461, %v1062
    %v1519 = vmul.f32 %v1463, %v1071
    %v1520 = vadd.f32 %v1504, %v1512
    %v1521 = vadd.f32 %v1505, %v1513
    %v1522 = vadd.f32 %v1506, %v1514
    %v1523 = vadd.f32 %v1507, %v1515
    %v1524 = vadd.f32 %v1508, %v1516
    %v1525 = vadd.f32 %v1509, %v1517
    %v1526 = vadd.f32 %v1510, %v1518
    %v1527 = vadd.f32 %v1511, %v1519
    %v1528 = vmul.f32 %v1520, %v1480
    %v1529 = vmul.f32 %v1521, %v1481
    %v1530 = vmul.f32 %v1522, %v1482
    %v1531 = vmul.f32 %v1523, %v1483
    %v1532 = vmul.f32 %v1524, %v1484
    %v1533 = vmul.f32 %v1525, %v1485
    %v1534 = vmul.f32 %v1526, %v1486
    %v1535 = vmul.f32 %v1527, %v1487
    %v1536 = vmul.f32 %v1002, %v1003
    %v1537 = vmul.f32 %v1011, %v1012
    %v1538 = vmul.f32 %v1020, %v1021
    %v1539 = vmul.f32 %v1029, %v1030
    %v1540 = vmul.f32 %v1038, %v1039
    %v1541 = vmul.f32 %v1047, %v1048
    %v1542 = vmul.f32 %v1056, %v1057
    %v1543 = vmul.f32 %v1065, %v1066
    %1544 = vadd.xlane.f32.xlu0 %v1536
    %v1545 = vpop.xlane.xlu0 %1544
    %1546 = vadd.xlane.f32.xlu0 %v1537
    %v1547 = vpop.xlane.xlu0 %1546
    %1548 = vadd.xlane.f32.xlu0 %v1538
    %v1549 = vpop.xlane.xlu0 %1548
    %1550 = vadd.xlane.f32.xlu0 %v1539
    %v1551 = vpop.xlane.xlu0 %1550
    %1552 = vadd.xlane.f32.xlu0 %v1540
    %v1553 = vpop.xlane.xlu0 %1552
    %1554 = vadd.xlane.f32.xlu0 %v1541
    %v1555 = vpop.xlane.xlu0 %1554
    %1556 = vadd.xlane.f32.xlu0 %v1542
    %v1557 = vpop.xlane.xlu0 %1556
    %1558 = vadd.xlane.f32.xlu0 %v1543
    %v1559 = vpop.xlane.xlu0 %1558
    %v1560 = vmul.f32 %v1002, %v1004
    %v1561 = vmul.f32 %v1011, %v1013
    %v1562 = vmul.f32 %v1020, %v1022
    %v1563 = vmul.f32 %v1029, %v1031
    %v1564 = vmul.f32 %v1038, %v1040
    %v1565 = vmul.f32 %v1047, %v1049
    %v1566 = vmul.f32 %v1056, %v1058
    %v1567 = vmul.f32 %v1065, %v1067
    %1568 = vadd.xlane.f32.xlu0 %v1560
    %v1569 = vpop.xlane.xlu0 %1568
    %1570 = vadd.xlane.f32.xlu0 %v1561
    %v1571 = vpop.xlane.xlu0 %1570
    %1572 = vadd.xlane.f32.xlu0 %v1562
    %v1573 = vpop.xlane.xlu0 %1572
    %1574 = vadd.xlane.f32.xlu0 %v1563
    %v1575 = vpop.xlane.xlu0 %1574
    %1576 = vadd.xlane.f32.xlu0 %v1564
    %v1577 = vpop.xlane.xlu0 %1576
    %1578 = vadd.xlane.f32.xlu0 %v1565
    %v1579 = vpop.xlane.xlu0 %1578
    %1580 = vadd.xlane.f32.xlu0 %v1566
    %v1581 = vpop.xlane.xlu0 %1580
    %1582 = vadd.xlane.f32.xlu0 %v1567
    %v1583 = vpop.xlane.xlu0 %1582
    %v1584 = vmul.f32 %v1002, %v1005
    %v1585 = vmul.f32 %v1011, %v1014
    %v1586 = vmul.f32 %v1020, %v1023
    %v1587 = vmul.f32 %v1029, %v1032
    %v1588 = vmul.f32 %v1038, %v1041
    %v1589 = vmul.f32 %v1047, %v1050
    %v1590 = vmul.f32 %v1056, %v1059
    %v1591 = vmul.f32 %v1065, %v1068
    %1592 = vadd.xlane.f32.xlu0 %v1584
    %v1593 = vpop.xlane.xlu0 %1592
    %1594 = vadd.xlane.f32.xlu0 %v1585
    %v1595 = vpop.xlane.xlu0 %1594
    %1596 = vadd.xlane.f32.xlu0 %v1586
    %v1597 = vpop.xlane.xlu0 %1596
    %1598 = vadd.xlane.f32.xlu0 %v1587
    %v1599 = vpop.xlane.xlu0 %1598
    %1600 = vadd.xlane.f32.xlu0 %v1588
    %v1601 = vpop.xlane.xlu0 %1600
    %1602 = vadd.xlane.f32.xlu0 %v1589
    %v1603 = vpop.xlane.xlu0 %1602
    %1604 = vadd.xlane.f32.xlu0 %v1590
    %v1605 = vpop.xlane.xlu0 %1604
    %1606 = vadd.xlane.f32.xlu0 %v1591
    %v1607 = vpop.xlane.xlu0 %1606
    %v1608 = vmax.f32 %v1545, %v1569
    %v1609 = vmax.f32 %v1547, %v1571
    %v1610 = vmax.f32 %v1549, %v1573
    %v1611 = vmax.f32 %v1551, %v1575
    %v1612 = vmax.f32 %v1553, %v1577
    %v1613 = vmax.f32 %v1555, %v1579
    %v1614 = vmax.f32 %v1557, %v1581
    %v1615 = vmax.f32 %v1559, %v1583
    %v1616 = vmax.f32 %v1608, %v1593
    %v1617 = vmax.f32 %v1609, %v1595
    %v1618 = vmax.f32 %v1610, %v1597
    %v1619 = vmax.f32 %v1611, %v1599
    %v1620 = vmax.f32 %v1612, %v1601
    %v1621 = vmax.f32 %v1613, %v1603
    %v1622 = vmax.f32 %v1614, %v1605
    %v1623 = vmax.f32 %v1615, %v1607
    %v1624 = vsub.f32 %v1545, %v1616
    %v1625 = vsub.f32 %v1547, %v1617
    %v1626 = vsub.f32 %v1549, %v1618
    %v1627 = vsub.f32 %v1551, %v1619
    %v1628 = vsub.f32 %v1553, %v1620
    %v1629 = vsub.f32 %v1555, %v1621
    %v1630 = vsub.f32 %v1557, %v1622
    %v1631 = vsub.f32 %v1559, %v1623
    %v1632 = vmul.f32 %v1624, 1.442695
    %v1633 = vpow.pop %v1632
    %v1634 = vmul.f32 %v1625, 1.442695
    %v1635 = vpow.pop %v1634
    %v1636 = vmul.f32 %v1626, 1.442695
    %v1637 = vpow.pop %v1636
    %v1638 = vmul.f32 %v1627, 1.442695
    %v1639 = vpow.pop %v1638
    %v1640 = vmul.f32 %v1628, 1.442695
    %v1641 = vpow.pop %v1640
    %v1642 = vmul.f32 %v1629, 1.442695
    %v1643 = vpow.pop %v1642
    %v1644 = vmul.f32 %v1630, 1.442695
    %v1645 = vpow.pop %v1644
    %v1646 = vmul.f32 %v1631, 1.442695
    %v1647 = vpow.pop %v1646
    %v1648 = vsub.f32 %v1569, %v1616
    %v1649 = vsub.f32 %v1571, %v1617
    %v1650 = vsub.f32 %v1573, %v1618
    %v1651 = vsub.f32 %v1575, %v1619
    %v1652 = vsub.f32 %v1577, %v1620
    %v1653 = vsub.f32 %v1579, %v1621
    %v1654 = vsub.f32 %v1581, %v1622
    %v1655 = vsub.f32 %v1583, %v1623
    %v1656 = vmul.f32 %v1648, 1.442695
    %v1657 = vpow.pop %v1656
    %v1658 = vmul.f32 %v1649, 1.442695
    %v1659 = vpow.pop %v1658
    %v1660 = vmul.f32 %v1650, 1.442695
    %v1661 = vpow.pop %v1660
    %v1662 = vmul.f32 %v1651, 1.442695
    %v1663 = vpow.pop %v1662
    %v1664 = vmul.f32 %v1652, 1.442695
    %v1665 = vpow.pop %v1664
    %v1666 = vmul.f32 %v1653, 1.442695
    %v1667 = vpow.pop %v1666
    %v1668 = vmul.f32 %v1654, 1.442695
    %v1669 = vpow.pop %v1668
    %v1670 = vmul.f32 %v1655, 1.442695
    %v1671 = vpow.pop %v1670
    %v1672 = vsub.f32 %v1593, %v1616
    %v1673 = vsub.f32 %v1595, %v1617
    %v1674 = vsub.f32 %v1597, %v1618
    %v1675 = vsub.f32 %v1599, %v1619
    %v1676 = vsub.f32 %v1601, %v1620
    %v1677 = vsub.f32 %v1603, %v1621
    %v1678 = vsub.f32 %v1605, %v1622
    %v1679 = vsub.f32 %v1607, %v1623
    %v1680 = vmul.f32 %v1672, 1.442695
    %v1681 = vpow.pop %v1680
    %v1682 = vmul.f32 %v1673, 1.442695
    %v1683 = vpow.pop %v1682
    %v1684 = vmul.f32 %v1674, 1.442695
    %v1685 = vpow.pop %v1684
    %v1686 = vmul.f32 %v1675, 1.442695
    %v1687 = vpow.pop %v1686
    %v1688 = vmul.f32 %v1676, 1.442695
    %v1689 = vpow.pop %v1688
    %v1690 = vmul.f32 %v1677, 1.442695
    %v1691 = vpow.pop %v1690
    %v1692 = vmul.f32 %v1678, 1.442695
    %v1693 = vpow.pop %v1692
    %v1694 = vmul.f32 %v1679, 1.442695
    %v1695 = vpow.pop %v1694
    %v1696 = vadd.f32 %v1633, %v1657
    %v1697 = vadd.f32 %v1635, %v1659
    %v1698 = vadd.f32 %v1637, %v1661
    %v1699 = vadd.f32 %v1639, %v1663
    %v1700 = vadd.f32 %v1641, %v1665
    %v1701 = vadd.f32 %v1643, %v1667
    %v1702 = vadd.f32 %v1645, %v1669
    %v1703 = vadd.f32 %v1647, %v1671
    %v1704 = vadd.f32 %v1696, %v1681
    %v1705 = vadd.f32 %v1697, %v1683
    %v1706 = vadd.f32 %v1698, %v1685
    %v1707 = vadd.f32 %v1699, %v1687
    %v1708 = vadd.f32 %v1700, %v1689
    %v1709 = vadd.f32 %v1701, %v1691
    %v1710 = vadd.f32 %v1702, %v1693
    %v1711 = vadd.f32 %v1703, %v1695
    %v1712 = vrcp.pop %v1704
    %v1713 = vrcp.pop %v1705
    %v1714 = vrcp.pop %v1706
    %v1715 = vrcp.pop %v1707
    %v1716 = vrcp.pop %v1708
    %v1717 = vrcp.pop %v1709
    %v1718 = vrcp.pop %v1710
    %v1719 = vrcp.pop %v1711
    %v1720 = vmul.f32 %v1633, %v1006
    %v1721 = vmul.f32 %v1635, %v1015
    %v1722 = vmul.f32 %v1637, %v1024
    %v1723 = vmul.f32 %v1639, %v1033
    %v1724 = vmul.f32 %v1641, %v1042
    %v1725 = vmul.f32 %v1643, %v1051
    %v1726 = vmul.f32 %v1645, %v1060
    %v1727 = vmul.f32 %v1647, %v1069
    %v1728 = vmul.f32 %v1657, %v1007
    %v1729 = vmul.f32 %v1659, %v1016
    %v1730 = vmul.f32 %v1661, %v1025
    %v1731 = vmul.f32 %v1663, %v1034
    %v1732 = vmul.f32 %v1665, %v1043
    %v1733 = vmul.f32 %v1667, %v1052
    %v1734 = vmul.f32 %v1669, %v1061
    %v1735 = vmul.f32 %v1671, %v1070
    %v1736 = vadd.f32 %v1720, %v1728
    %v1737 = vadd.f32 %v1721, %v1729
    %v1738 = vadd.f32 %v1722, %v1730
    %v1739 = vadd.f32 %v1723, %v1731
    %v1740 = vadd.f32 %v1724, %v1732
    %v1741 = vadd.f32 %v1725, %v1733
    %v1742 = vadd.f32 %v1726, %v1734
    %v1743 = vadd.f32 %v1727, %v1735
    %v1744 = vmul.f32 %v1681, %v1008
    %v1745 = vmul.f32 %v1683, %v1017
    %v1746 = vmul.f32 %v1685, %v1026
    %v1747 = vmul.f32 %v1687, %v1035
    %v1748 = vmul.f32 %v1689, %v1044
    %v1749 = vmul.f32 %v1691, %v1053
    %v1750 = vmul.f32 %v1693, %v1062
    %v1751 = vmul.f32 %v1695, %v1071
    %v1752 = vadd.f32 %v1736, %v1744
    %v1753 = vadd.f32 %v1737, %v1745
    %v1754 = vadd.f32 %v1738, %v1746
    %v1755 = vadd.f32 %v1739, %v1747
    %v1756 = vadd.f32 %v1740, %v1748
    %v1757 = vadd.f32 %v1741, %v1749
    %v1758 = vadd.f32 %v1742, %v1750
    %v1759 = vadd.f32 %v1743, %v1751
    %v1760 = vmul.f32 %v1752, %v1712
    %v1761 = vmul.f32 %v1753, %v1713
    %v1762 = vmul.f32 %v1754, %v1714
    %v1763 = vmul.f32 %v1755, %v1715
    %v1764 = vmul.f32 %v1756, %v1716
    %v1765 = vmul.f32 %v1757, %v1717
    %v1766 = vmul.f32 %v1758, %v1718
    %v1767 = vmul.f32 %v1759, %v1719
    %v1768 = vld [vmem:[#allocation8] sm:$0xff]
    %v1769 = vld [vmem:[#allocation8 + $0x8] sm:$0xff]
    %v1770 = vld [vmem:[#allocation8 + $0x10] sm:$0xff]
    %v1771 = vld [vmem:[#allocation8 + $0x18] sm:$0xff]
    %v1772 = vld [vmem:[#allocation8 + $0x20] sm:$0xff]
    %v1773 = vld [vmem:[#allocation8 + $0x28] sm:$0xff]
    %v1774 = vld [vmem:[#allocation8 + $0x30] sm:$0xff]
    %v1775 = vld [vmem:[#allocation8 + $0x38] sm:$0xff]
    %v1776 = vld [vmem:[#allocation8 + $0x40] sm:$0xff]
    %v1777 = vld [vmem:[#allocation8 + $0x48] sm:$0xff]
    %v1778 = vld [vmem:[#allocation8 + $0x50] sm:$0xff]
    %v1779 = vld [vmem:[#allocation8 + $0x58] sm:$0xff]
    %v1780 = vld [vmem:[#allocation8 + $0x60] sm:$0xff]
    %v1781 = vld [vmem:[#allocation8 + $0x68] sm:$0xff]
    %v1782 = vld [vmem:[#allocation8 + $0x70] sm:$0xff]
    %v1783 = vld [vmem:[#allocation8 + $0x78] sm:$0xff]
    %v1784 = vld [vmem:[#allocation8 + $0x80] sm:$0xff]
    %v1785 = vld [vmem:[#allocation8 + $0x88] sm:$0xff]
    %v1786 = vld [vmem:[#allocation8 + $0x90] sm:$0xff]
    %v1787 = vld [vmem:[#allocation8 + $0x98] sm:$0xff]
    %v1788 = vld [vmem:[#allocation8 + $0xa0] sm:$0xff]
    %v1789 = vld [vmem:[#allocation8 + $0xa8] sm:$0xff]
    %v1790 = vld [vmem:[#allocation8 + $0xb0] sm:$0xff]
    %v1791 = vld [vmem:[#allocation8 + $0xb8] sm:$0xff]
    %v1792 = vld [vmem:[#allocation8 + $0xc0] sm:$0xff]
    %v1793 = vld [vmem:[#allocation8 + $0xc8] sm:$0xff]
    %v1794 = vld [vmem:[#allocation8 + $0xd0] sm:$0xff]
    %v1795 = vld [vmem:[#allocation8 + $0xd8] sm:$0xff]
    %v1796 = vld [vmem:[#allocation8 + $0xe0] sm:$0xff]
    %v1797 = vld [vmem:[#allocation8 + $0xe8] sm:$0xff]
    %v1798 = vld [vmem:[#allocation8 + $0xf0] sm:$0xff]
    %v1799 = vld [vmem:[#allocation8 + $0xf8] sm:$0xff]
    %v1800 = vld [vmem:[#allocation8 + $0x100] sm:$0xff]
    %v1801 = vld [vmem:[#allocation8 + $0x108] sm:$0xff]
    %v1802 = vld [vmem:[#allocation8 + $0x110] sm:$0xff]
    %v1803 = vld [vmem:[#allocation8 + $0x118] sm:$0xff]
    %v1804 = vld [vmem:[#allocation8 + $0x120] sm:$0xff]
    %v1805 = vld [vmem:[#allocation8 + $0x128] sm:$0xff]
    %v1806 = vld [vmem:[#allocation8 + $0x130] sm:$0xff]
    %v1807 = vld [vmem:[#allocation8 + $0x138] sm:$0xff]
    %v1808 = vld [vmem:[#allocation8 + $0x140] sm:$0xff]
    %v1809 = vld [vmem:[#allocation8 + $0x148] sm:$0xff]
    %v1810 = vld [vmem:[#allocation8 + $0x150] sm:$0xff]
    %v1811 = vld [vmem:[#allocation8 + $0x158] sm:$0xff]
    %v1812 = vld [vmem:[#allocation8 + $0x160] sm:$0xff]
    %v1813 = vld [vmem:[#allocation8 + $0x168] sm:$0xff]
    %v1814 = vld [vmem:[#allocation8 + $0x170] sm:$0xff]
    %v1815 = vld [vmem:[#allocation8 + $0x178] sm:$0xff]
    %v1816 = vlaneseq
    %v1817 = vshrl.u32 %v1816, 7
    %v1818 = vsub.s32 0, %v1817
    %v1819 = vrot.slane %v109, %v1818
    %1820 = vmatprep.subr.mxu0 0.0
    %1821 = vmatpush1.msra.mxu0 %v1768
    %1822 = vmatprep.subr.mxu0 0.0
    %1823 = vmatpush1.msra.mxu0 %v1769
    %1824 = vmatprep.subr.mxu0 0.0
    %1825 = vmatpush1.msra.mxu0 %v1770
    %1826 = vmatprep.subr.mxu0 0.0
    %1827 = vmatpush1.msra.mxu0 %v1771
    %1828 = vmatprep.subr.mxu0 0.0
    %1829 = vmatpush1.msra.mxu0 %v1772
    %1830 = vmatprep.subr.mxu0 0.0
    %1831 = vmatpush1.msra.mxu0 %v1773
    %1832 = vmatprep.subr.mxu0 0.0
    %1833 = vmatpush1.msra.mxu0 %v1774
    %1834 = vmatprep.subr.mxu0 0.0
    %1835 = vmatpush1.msra.mxu0 %v1775
    %1836 = vmatprep.subr.mxu0 0.0
    %1837 = vmatpush1.msra.mxu0 %v1776
    %1838 = vmatprep.subr.mxu0 0.0
    %1839 = vmatpush1.msra.mxu0 %v1777
    %1840 = vmatprep.subr.mxu0 0.0
    %1841 = vmatpush1.msra.mxu0 %v1778
    %1842 = vmatprep.subr.mxu0 0.0
    %1843 = vmatpush1.msra.mxu0 %v1779
    %1844 = vmatprep.subr.mxu0 0.0
    %1845 = vmatpush1.msra.mxu0 %v1780
    %1846 = vmatprep.subr.mxu0 0.0
    %1847 = vmatpush1.msra.mxu0 %v1781
    %1848 = vmatprep.subr.mxu0 0.0
    %1849 = vmatpush1.msra.mxu0 %v1782
    %1850 = vmatprep.subr.mxu0 0.0
    %1851 = vmatpush1.msra.mxu0 %v1783
    %1852 = vmatprep.subr.mxu0 0.0
    %1853 = vmatpush1.msra.mxu0 %v1784
    %1854 = vmatprep.subr.mxu0 0.0
    %1855 = vmatpush1.msra.mxu0 %v1785
    %1856 = vmatprep.subr.mxu0 0.0
    %1857 = vmatpush1.msra.mxu0 %v1786
    %1858 = vmatprep.subr.mxu0 0.0
    %1859 = vmatpush1.msra.mxu0 %v1787
    %1860 = vmatprep.subr.mxu0 0.0
    %1861 = vmatpush1.msra.mxu0 %v1788
    %1862 = vmatprep.subr.mxu0 0.0
    %1863 = vmatpush1.msra.mxu0 %v1789
    %1864 = vmatprep.subr.mxu0 0.0
    %1865 = vmatpush1.msra.mxu0 %v1790
    %1866 = vmatprep.subr.mxu0 0.0
    %1867 = vmatpush1.msra.mxu0 %v1791
    %1868 = vmatprep.subr.mxu0 0.0
    %1869 = vmatpush1.msra.mxu0 %v1792
    %1870 = vmatprep.subr.mxu0 0.0
    %1871 = vmatpush1.msra.mxu0 %v1793
    %1872 = vmatprep.subr.mxu0 0.0
    %1873 = vmatpush1.msra.mxu0 %v1794
    %1874 = vmatprep.subr.mxu0 0.0
    %1875 = vmatpush1.msra.mxu0 %v1795
    %1876 = vmatprep.subr.mxu0 0.0
    %1877 = vmatpush1.msra.mxu0 %v1796
    %1878 = vmatprep.subr.mxu0 0.0
    %1879 = vmatpush1.msra.mxu0 %v1797
    %1880 = vmatprep.subr.mxu0 0.0
    %1881 = vmatpush1.msra.mxu0 %v1798
    %1882 = vmatprep.subr.mxu0 0.0
    %1883 = vmatpush1.msra.mxu0 %v1799
    %1884 = vmatprep.mubr.f32.mxu0 %v1528
    %1885 = vmatmul.mubr.f32.gmra.mrb[0].mxu0 %v1296
    %v1886 = vpop.f32.mrb[0].mxu0
    %v1887 = vadd.f32 %v1819, %v1886
    %v1888 = vpop.f32.mrb[0].mxu0
    %1889 = vmatprep.mubr.f32.mxu0 %v1529
    %1890 = vmatmul.mubr.f32.gmra.mrb[0].mxu0 %v1297
    %v1891 = vpop.f32.mrb[0].mxu0
    %v1892 = vadd.f32 %v1819, %v1891
    %v1893 = vpop.f32.mrb[0].mxu0
    %1894 = vmatprep.mubr.f32.mxu0 %v1530
    %1895 = vmatmul.mubr.f32.gmra.mrb[0].mxu0 %v1298
    %v1896 = vpop.f32.mrb[0].mxu0
    %v1897 = vadd.f32 %v1819, %v1896
    %v1898 = vpop.f32.mrb[0].mxu0
    %1899 = vmatprep.mubr.f32.mxu0 %v1531
    %1900 = vmatmul.mubr.f32.gmra.mrb[0].mxu0 %v1299
    %v1901 = vpop.f32.mrb[0].mxu0
    %v1902 = vadd.f32 %v1819, %v1901
    %v1903 = vpop.f32.mrb[0].mxu0
    %1904 = vmatprep.mubr.f32.mxu0 %v1532
    %1905 = vmatmul.mubr.f32.gmra.mrb[0].mxu0 %v1300
    %v1906 = vpop.f32.mrb[0].mxu0
    %v1907 = vadd.f32 %v1819, %v1906
    %v1908 = vpop.f32.mrb[0].mxu0
    %1909 = vmatprep.mubr.f32.mxu0 %v1533
    %1910 = vmatmul.mubr.f32.gmra.mrb[0].mxu0 %v1301
    %v1911 = vpop.f32.mrb[0].mxu0
    %v1912 = vadd.f32 %v1819, %v1911
    %v1913 = vpop.f32.mrb[0].mxu0
    %1914 = vmatprep.mubr.f32.mxu0 %v1534
    %1915 = vmatmul.mubr.f32.gmra.mrb[0].mxu0 %v1302
    %v1916 = vpop.f32.mrb[0].mxu0
    %v1917 = vadd.f32 %v1819, %v1916
    %v1918 = vpop.f32.mrb[0].mxu0
    %1919 = vmatprep.mubr.f32.mxu0 %v1535
    %1920 = vmatmul.mubr.f32.gmra.mrb[0].mxu0 %v1303
    %v1921 = vpop.f32.mrb[0].mxu0
    %v1922 = vadd.f32 %v1819, %v1921
    %v1923 = vpop.f32.mrb[0].mxu0
    %1924 = vdwg.mxu0
    %1925 = vmatprep.subr.mxu0 0.0
    %1926 = vmatpush1.msra.mxu0 %v1800
    %1927 = vmatprep.subr.mxu0 0.0
    %1928 = vmatpush1.msra.mxu0 %v1801
    %1929 = vmatprep.subr.mxu0 0.0
    %1930 = vmatpush1.msra.mxu0 %v1802
    %1931 = vmatprep.subr.mxu0 0.0
    %1932 = vmatpush1.msra.mxu0 %v1803
    %1933 = vmatprep.subr.mxu0 0.0
    %1934 = vmatpush1.msra.mxu0 %v1804
    %1935 = vmatprep.subr.mxu0 0.0
    %1936 = vmatpush1.msra.mxu0 %v1805
    %1937 = vmatprep.subr.mxu0 0.0
    %1938 = vmatpush1.msra.mxu0 %v1806
    %1939 = vmatprep.subr.mxu0 0.0
    %1940 = vmatpush1.msra.mxu0 %v1807
    %1941 = vmatprep.subr.mxu0 0.0
    %1942 = vmatpush1.msra.mxu0 %v1808
    %1943 = vmatprep.subr.mxu0 0.0
    %1944 = vmatpush1.msra.mxu0 %v1809
    %1945 = vmatprep.subr.mxu0 0.0
    %1946 = vmatpush1.msra.mxu0 %v1810
    %1947 = vmatprep.subr.mxu0 0.0
    %1948 = vmatpush1.msra.mxu0 %v1811
    %1949 = vmatprep.subr.mxu0 0.0
    %1950 = vmatpush1.msra.mxu0 %v1812
    %1951 = vmatprep.subr.mxu0 0.0
    %1952 = vmatpush1.msra.mxu0 %v1813
    %1953 = vmatprep.subr.mxu0 0.0
    %1954 = vmatpush1.msra.mxu0 %v1814
    %1955 = vmatprep.subr.mxu0 0.0
    %1956 = vmatpush1.msra.mxu0 %v1815
    %1957 = vmatprep.subr.mxu0 0.0
    %1958 = vmatpush1.msra.mxu0 0.0
    %1959 = vmatprep.subr.mxu0 0.0
    %1960 = vmatpush1.msra.mxu0 0.0
    %1961 = vmatprep.subr.mxu0 0.0
    %1962 = vmatpush1.msra.mxu0 0.0
    %1963 = vmatprep.subr.mxu0 0.0
    %1964 = vmatpush1.msra.mxu0 0.0
    %1965 = vmatprep.subr.mxu0 0.0
    %1966 = vmatpush1.msra.mxu0 0.0
    %1967 = vmatprep.subr.mxu0 0.0
    %1968 = vmatpush1.msra.mxu0 0.0
    %1969 = vmatprep.subr.mxu0 0.0
    %1970 = vmatpush1.msra.mxu0 0.0
    %1971 = vmatprep.subr.mxu0 0.0
    %1972 = vmatpush1.msra.mxu0 0.0
    %1973 = vmatprep.subr.mxu0 0.0
    %1974 = vmatpush1.msra.mxu0 0.0
    %1975 = vmatprep.subr.mxu0 0.0
    %1976 = vmatpush1.msra.mxu0 0.0
    %1977 = vmatprep.subr.mxu0 0.0
    %1978 = vmatpush1.msra.mxu0 0.0
    %1979 = vmatprep.subr.mxu0 0.0
    %1980 = vmatpush1.msra.mxu0 0.0
    %1981 = vmatprep.subr.mxu0 0.0
    %1982 = vmatpush1.msra.mxu0 0.0
    %1983 = vmatprep.subr.mxu0 0.0
    %1984 = vmatpush1.msra.mxu0 0.0
    %1985 = vmatprep.subr.mxu0 0.0
    %1986 = vmatpush1.msra.mxu0 0.0
    %1987 = vmatprep.subr.mxu0 0.0
    %1988 = vmatpush1.msra.mxu0 0.0
    %1989 = vmatprep.mubr.f32.mxu0 0.0
    %1990 = vmatmul.mubr.f32.gmra.mrb[0].mxu0 %v1760
    %v1991 = vpop.f32.mrb[0].mxu0
    %v1992 = vadd.f32 %v1887, %v1991
    %v1993 = vpop.f32.mrb[0].mxu0
    %1994 = vmatprep.mubr.f32.mxu0 0.0
    %1995 = vmatmul.mubr.f32.gmra.mrb[0].mxu0 %v1761
    %v1996 = vpop.f32.mrb[0].mxu0
    %v1997 = vadd.f32 %v1892, %v1996
    %v1998 = vpop.f32.mrb[0].mxu0
    %1999 = vmatprep.mubr.f32.mxu0 0.0
    %2000 = vmatmul.mubr.f32.gmra.mrb[0].mxu0 %v1762
    %v2001 = vpop.f32.mrb[0].mxu0
    %v2002 = vadd.f32 %v1897, %v2001
    %v2003 = vpop.f32.mrb[0].mxu0
    %2004 = vmatprep.mubr.f32.mxu0 0.0
    %2005 = vmatmul.mubr.f32.gmra.mrb[0].mxu0 %v1763
    %v2006 = vpop.f32.mrb[0].mxu0
    %v2007 = vadd.f32 %v1902, %v2006
    %v2008 = vpop.f32.mrb[0].mxu0
    %2009 = vmatprep.mubr.f32.mxu0 0.0
    %2010 = vmatmul.mubr.f32.gmra.mrb[0].mxu0 %v1764
    %v2011 = vpop.f32.mrb[0].mxu0
    %v2012 = vadd.f32 %v1907, %v2011
    %v2013 = vpop.f32.mrb[0].mxu0
    %2014 = vmatprep.mubr.f32.mxu0 0.0
    %2015 = vmatmul.mubr.f32.gmra.mrb[0].mxu0 %v1765
    %v2016 = vpop.f32.mrb[0].mxu0
    %v2017 = vadd.f32 %v1912, %v2016
    %v2018 = vpop.f32.mrb[0].mxu0
    %2019 = vmatprep.mubr.f32.mxu0 0.0
    %2020 = vmatmul.mubr.f32.gmra.mrb[0].mxu0 %v1766
    %v2021 = vpop.f32.mrb[0].mxu0
    %v2022 = vadd.f32 %v1917, %v2021
    %v2023 = vpop.f32.mrb[0].mxu0
    %2024 = vmatprep.mubr.f32.mxu0 0.0
    %2025 = vmatmul.mubr.f32.gmra.mrb[0].mxu0 %v1767
    %v2026 = vpop.f32.mrb[0].mxu0
    %v2027 = vadd.f32 %v1922, %v2026
    %v2028 = vpop.f32.mrb[0].mxu0
    %2029 = vdwg.mxu0
    %v2030 = vmax.f32 %v1992, 0.0
    %v2031 = vmax.f32 %v1997, 0.0
    %v2032 = vmax.f32 %v2002, 0.0
    %v2033 = vmax.f32 %v2007, 0.0
    %v2034 = vmax.f32 %v2012, 0.0
    %v2035 = vmax.f32 %v2017, 0.0
    %v2036 = vmax.f32 %v2022, 0.0
    %v2037 = vmax.f32 %v2027, 0.0
    %v2038 = vld [vmem:[#allocation10] sm:$0xff]
    %v2039 = vld [vmem:[#allocation10 + $0x8] sm:$0xff]
    %v2040 = vld [vmem:[#allocation10 + $0x10] sm:$0xff]
    %v2041 = vld [vmem:[#allocation10 + $0x18] sm:$0xff]
    %v2042 = vld [vmem:[#allocation10 + $0x20] sm:$0xff]
    %v2043 = vld [vmem:[#allocation10 + $0x28] sm:$0xff]
    %v2044 = vld [vmem:[#allocation10 + $0x30] sm:$0xff]
    %v2045 = vld [vmem:[#allocation10 + $0x38] sm:$0xff]
    %v2046 = vld [vmem:[#allocation10 + $0x40] sm:$0xff]
    %v2047 = vld [vmem:[#allocation10 + $0x48] sm:$0xff]
    %v2048 = vld [vmem:[#allocation10 + $0x50] sm:$0xff]
    %v2049 = vld [vmem:[#allocation10 + $0x58] sm:$0xff]
    %v2050 = vld [vmem:[#allocation10 + $0x60] sm:$0xff]
    %v2051 = vld [vmem:[#allocation10 + $0x68] sm:$0xff]
    %v2052 = vld [vmem:[#allocation10 + $0x70] sm:$0xff]
    %v2053 = vld [vmem:[#allocation10 + $0x78] sm:$0xff]
    %v2054 = vlaneseq
    %v2055 = vshrl.u32 %v2054, 7
    %v2056 = vsub.s32 0, %v2055
    %v2057 = vrot.slane %v110, %v2056
    %2058 = vmatprep.subr.mxu0 0.0
    %2059 = vmatpush1.msra.mxu0 %v2038
    %2060 = vmatprep.subr.mxu0 0.0
    %2061 = vmatpush1.msra.mxu0 %v2039
    %2062 = vmatprep.subr.mxu0 0.0
    %2063 = vmatpush1.msra.mxu0 %v2040
    %2064 = vmatprep.subr.mxu0 0.0
    %2065 = vmatpush1.msra.mxu0 %v2041
    %2066 = vmatprep.subr.mxu0 0.0
    %2067 = vmatpush1.msra.mxu0 %v2042
    %2068 = vmatprep.subr.mxu0 0.0
    %2069 = vmatpush1.msra.mxu0 %v2043
    %2070 = vmatprep.subr.mxu0 0.0
    %2071 = vmatpush1.msra.mxu0 %v2044
    %2072 = vmatprep.subr.mxu0 0.0
    %2073 = vmatpush1.msra.mxu0 %v2045
    %2074 = vmatprep.subr.mxu0 0.0
    %2075 = vmatpush1.msra.mxu0 %v2046
    %2076 = vmatprep.subr.mxu0 0.0
    %2077 = vmatpush1.msra.mxu0 %v2047
    %2078 = vmatprep.subr.mxu0 0.0
    %2079 = vmatpush1.msra.mxu0 %v2048
    %2080 = vmatprep.subr.mxu0 0.0
    %2081 = vmatpush1.msra.mxu0 %v2049
    %2082 = vmatprep.subr.mxu0 0.0
    %2083 = vmatpush1.msra.mxu0 %v2050
    %2084 = vmatprep.subr.mxu0 0.0
    %2085 = vmatpush1.msra.mxu0 %v2051
    %2086 = vmatprep.subr.mxu0 0.0
    %2087 = vmatpush1.msra.mxu0 %v2052
    %2088 = vmatprep.subr.mxu0 0.0
    %2089 = vmatpush1.msra.mxu0 %v2053
    %2090 = vmatprep.subr.mxu0 0.0
    %2091 = vmatpush1.msra.mxu0 0.0
    %2092 = vmatprep.subr.mxu0 0.0
    %2093 = vmatpush1.msra.mxu0 0.0
    %2094 = vmatprep.subr.mxu0 0.0
    %2095 = vmatpush1.msra.mxu0 0.0
    %2096 = vmatprep.subr.mxu0 0.0
    %2097 = vmatpush1.msra.mxu0 0.0
    %2098 = vmatprep.subr.mxu0 0.0
    %2099 = vmatpush1.msra.mxu0 0.0
    %2100 = vmatprep.subr.mxu0 0.0
    %2101 = vmatpush1.msra.mxu0 0.0
    %2102 = vmatprep.subr.mxu0 0.0
    %2103 = vmatpush1.msra.mxu0 0.0
    %2104 = vmatprep.subr.mxu0 0.0
    %2105 = vmatpush1.msra.mxu0 0.0
    %2106 = vmatprep.subr.mxu0 0.0
    %2107 = vmatpush1.msra.mxu0 0.0
    %2108 = vmatprep.subr.mxu0 0.0
    %2109 = vmatpush1.msra.mxu0 0.0
    %2110 = vmatprep.subr.mxu0 0.0
    %2111 = vmatpush1.msra.mxu0 0.0
    %2112 = vmatprep.subr.mxu0 0.0
    %2113 = vmatpush1.msra.mxu0 0.0
    %2114 = vmatprep.subr.mxu0 0.0
    %2115 = vmatpush1.msra.mxu0 0.0
    %2116 = vmatprep.subr.mxu0 0.0
    %2117 = vmatpush1.msra.mxu0 0.0
    %2118 = vmatprep.subr.mxu0 0.0
    %2119 = vmatpush1.msra.mxu0 0.0
    %2120 = vmatprep.subr.mxu0 0.0
    %2121 = vmatpush1.msra.mxu0 0.0
    %2122 = vmatprep.mubr.f32.mxu0 0.0
    %2123 = vmatmul.mubr.f32.gmra.mrb[0].mxu0 %v2030
    %v2124 = vpop.f32.mrb[0].mxu0
    %v2125 = vadd.f32 %v2057, %v2124
    %v2126 = vpop.f32.mrb[0].mxu0
    %2127 = vmatprep.mubr.f32.mxu0 0.0
    %2128 = vmatmul.mubr.f32.gmra.mrb[0].mxu0 %v2031
    %v2129 = vpop.f32.mrb[0].mxu0
    %v2130 = vadd.f32 %v2057, %v2129
    %v2131 = vpop.f32.mrb[0].mxu0
    %2132 = vmatprep.mubr.f32.mxu0 0.0
    %2133 = vmatmul.mubr.f32.gmra.mrb[0].mxu0 %v2032
    %v2134 = vpop.f32.mrb[0].mxu0
    %v2135 = vadd.f32 %v2057, %v2134
    %v2136 = vpop.f32.mrb[0].mxu0
    %2137 = vmatprep.mubr.f32.mxu0 0.0
    %2138 = vmatmul.mubr.f32.gmra.mrb[0].mxu0 %v2033
    %v2139 = vpop.f32.mrb[0].mxu0
    %v2140 = vadd.f32 %v2057, %v2139
    %v2141 = vpop.f32.mrb[0].mxu0
    %2142 = vmatprep.mubr.f32.mxu0 0.0
    %2143 = vmatmul.mubr.f32.gmra.mrb[0].mxu0 %v2034
    %v2144 = vpop.f32.mrb[0].mxu0
    %v2145 = vadd.f32 %v2057, %v2144
    %v2146 = vpop.f32.mrb[0].mxu0
    %2147 = vmatprep.mubr.f32.mxu0 0.0
    %2148 = vmatmul.mubr.f32.gmra.mrb[0].mxu0 %v2035
    %v2149 = vpop.f32.mrb[0].mxu0
    %v2150 = vadd.f32 %v2057, %v2149
    %v2151 = vpop.f32.mrb[0].mxu0
    %2152 = vmatprep.mubr.f32.mxu0 0.0
    %2153 = vmatmul.mubr.f32.gmra.mrb[0].mxu0 %v2036
    %v2154 = vpop.f32.mrb[0].mxu0
    %v2155 = vadd.f32 %v2057, %v2154
    %v2156 = vpop.f32.mrb[0].mxu0
    %2157 = vmatprep.mubr.f32.mxu0 0.0
    %2158 = vmatmul.mubr.f32.gmra.mrb[0].mxu0 %v2037
    %v2159 = vpop.f32.mrb[0].mxu0
    %v2160 = vadd.f32 %v2057, %v2159
    %v2161 = vpop.f32.mrb[0].mxu0
    %2162 = vdwg.mxu0
    %v2163 = vmax.f32 %v2125, 0.0
    %v2164 = vmax.f32 %v2130, 0.0
    %v2165 = vmax.f32 %v2135, 0.0
    %v2166 = vmax.f32 %v2140, 0.0
    %v2167 = vmax.f32 %v2145, 0.0
    %v2168 = vmax.f32 %v2150, 0.0
    %v2169 = vmax.f32 %v2155, 0.0
    %v2170 = vmax.f32 %v2160, 0.0
    %2171 = vst [vmem:[#allocation13] sm:$0xff] %v2163
    %2172 = vst [vmem:[#allocation13 + $0x8] sm:$0xff] %v2164
    %2173 = vst [vmem:[#allocation13 + $0x10] sm:$0xff] %v2165
    %2174 = vst [vmem:[#allocation13 + $0x18] sm:$0xff] %v2166
    %2175 = vst [vmem:[#allocation13 + $0x20] sm:$0xff] %v2167
    %2176 = vst [vmem:[#allocation13 + $0x28] sm:$0xff] %v2168
    %2177 = vst [vmem:[#allocation13 + $0x30] sm:$0xff] %v2169
    %2178 = vst [vmem:[#allocation13 + $0x38] sm:$0xff] %v2170
    // Predicated region
    $region50: #{tpu_custom_call.1} parent=1 // pred_check
      _
    $region51: #{tpu_custom_call.1} parent=1 // pred_check_branch
      %2180 = sbr.rel (0) target = $region53
    $region52: #{tpu_custom_call.1} parent=1 // pred_region
      %s2182 = ssub.s32 1024, 1024
      %2183 = vsyncadd [#allocation4], %s2182
      %s2184 = sshll.u32 [#allocation13], 4
      %s2185 = int_to_ptr.vmem [resolvable:$true] %s2184
      %2190 = dma.vmem_to_hbm [thread:$0]  %s2185, 1024, %s6, [#allocation4], 128, 128, 8
    $region53: #{tpu_custom_call.1} parent=1 // pred_fallthru
      _
    // Predicated region
    $region54: #{tpu_custom_call.1} parent=1 // pred_check
      _
    $region55: #{tpu_custom_call.1} parent=1 // pred_check_branch
      %2192 = sbr.rel (0) target = $region57
    $region56: #{tpu_custom_call.1} parent=1 // pred_region
      %2193 = dma.done [#allocation4], 1024
    $region57: #{tpu_custom_call.1} parent=1 // pred_fallthru
      _
    %2194 = vsyncpa [#allocation3], 1
    %2195 = vsyncpa [#allocation6], 1
    %2196 = vsyncpa [#allocation9], 1
    %2197 = vsyncpa [#allocation12], 1
    %2198 = vsyncpa [#allocation4], 1

</llo_original>
